<compile_context>
chip_gen: v5e
topology: v5e:2x2
jax: 0.10.0
libtpu: 0.0.40
codegen_flags: <defaults>
</compile_context>

<pallas_src>
import numpy as np
import jax
import jax.numpy as jnp
from jax.experimental import pallas as pl
from jax.experimental.pallas import tpu as pltpu


# ----------------------------- fused Pallas kernel ------------------------------

def _fused_forward_kernel(cls_ref, xs_ref, mask_ref,
                          wc_ref, wfe_ref, bfe_ref,
                          wroom_ref, broom_ref,
                          wfc_ref, bfc_ref,
                          tok_ref, room_ref):
    """Grid axis 0 tiles the flattened (batch*seq) token rows.

    cls_ref  : [TM, C]     one-hot / soft class labels (token-row tile)
    xs_ref   : [TM, 224]   scalars pre-broadcast against sigma (scalar-major, sigma-minor)
    mask_ref : [B, Fm]     flattened room masks (full batch, VMEM-resident)
    wc_ref   : [C, 64]     fc_class (no bias)
    wfe/bfe  : [Fm, Fs] / [1, Fs]       stand-in feature extractor (flatten + linear)
    wroom/broom : [Fs, 512] / [1, 512]  fc_room_f, columns permuted to [cls|sin|cos] basis
    wfc/bfc  : [512, H] / [1, H]        final fc, rows permuted to the same basis
    tok_ref  : [TM, H]     per-box embeddings for this row tile
    room_ref : [B, H]      start-symbol (room) features, written once at step 0
    """
    f32 = jnp.float32

    # --- room path for the WHOLE batch, computed once (constant output block) ---
    @pl.when(pl.program_id(0) == 0)
    def _():
        feat = jnp.dot(mask_ref[...], wfe_ref[...],
                       preferred_element_type=f32) + bfe_ref[...]            # [B, Fs]
        room = jnp.dot(feat, wroom_ref[...],
                       preferred_element_type=f32) + broom_ref[...]          # [B, 512]
        room_ref[...] = (jnp.dot(room, wfc_ref[...], preferred_element_type=f32)
                         + bfc_ref[...]).astype(room_ref.dtype)              # [B, H]

    # --- token path: fc_class + fixed positional encodings (2 wide EUP ops) ---
    cls_f = jnp.dot(cls_ref[...], wc_ref[...], preferred_element_type=f32)   # [TM, 64]
    xs = xs_ref[...]                                                          # [TM, 224]
    sin_x = jnp.sin(xs)
    cos_x = jnp.cos(xs)

    # --- final fc 512 -> H split over the permuted row blocks so the 512-wide
    #     token embedding is never materialized / concatenated ---
    tok = (jnp.dot(cls_f, wfc_ref[0:64, :],    preferred_element_type=f32)
           + jnp.dot(sin_x, wfc_ref[64:288, :],  preferred_element_type=f32)
           + jnp.dot(cos_x, wfc_ref[288:512, :], preferred_element_type=f32)
           + bfc_ref[...])                                                    # [TM, H]
    tok_ref[...] = tok.astype(tok_ref.dtype)


def fused_forward(params, cls2d, xs2d, mask2d):
    """cls2d: [B*L, C], xs2d: [B*L, 224], mask2d: [B, Fm] -> (tok [Npad, H], room [B, H])."""
    N, C = cls2d.shape
    B, Fm = mask2d.shape
    Fs = params["w_fe"].shape[1]
    H = params["w_fc_perm"].shape[1]

    # Tile token rows; small problems run as a single grid step with no padding.
    TM = N if N <= 512 else 256
    n_tiles = -(-N // TM)
    Npad = n_tiles * TM
    if Npad != N:
        cls2d = jnp.pad(cls2d, ((0, Npad - N), (0, 0)))
        xs2d = jnp.pad(xs2d, ((0, Npad - N), (0, 0)))

    tok_out, room_out = pl.pallas_call(
        _fused_forward_kernel,
        out_shape=(jax.ShapeDtypeStruct((Npad, H), jnp.float32),
                   jax.ShapeDtypeStruct((B, H), jnp.float32)),
        grid=(n_tiles,),
        in_specs=[
            # token-row tiles
            pl.BlockSpec((TM, C), lambda i: (i, 0)),
            pl.BlockSpec((TM, 224), lambda i: (i, 0)),
            # full-batch room masks (resident)
            pl.BlockSpec((B, Fm), lambda i: (0, 0)),
            # VMEM-resident weights (same block for every grid step)
            pl.BlockSpec((C, 64), lambda i: (0, 0)),
            pl.BlockSpec((Fm, Fs), lambda i: (0, 0)),
            pl.BlockSpec((1, Fs), lambda i: (0, 0)),
            pl.BlockSpec((Fs, 512), lambda i: (0, 0)),
            pl.BlockSpec((1, 512), lambda i: (0, 0)),
            pl.BlockSpec((512, H), lambda i: (0, 0)),
            pl.BlockSpec((1, H), lambda i: (0, 0)),
        ],
        out_specs=(pl.BlockSpec((TM, H), lambda i: (i, 0)),
                   pl.BlockSpec((B, H), lambda i: (0, 0))),
        compiler_params=pltpu.CompilerParams(
            # room output block index is constant across the grid -> axis is arbitrary
            dimension_semantics=("arbitrary",),
        ),
    )(
        cls2d, xs2d, mask2d,
        params["w_class"],
        params["w_fe"], params["b_fe"].reshape(1, Fs),
        params["w_room_perm"], params["b_room_perm"].reshape(1, 512),
        params["w_fc_perm"], params["b_fc"].reshape(1, H),
    )
    return tok_out, room_out


# ----------------------------- model wrapper -------------------------------

def fixed_pe_sigma(proj_dims=64, val=0.1):
    ll = proj_dims // 2
    exb = 2.0 * jnp.linspace(0.0, ll - 1, ll) / proj_dims
    sigma = 1.0 / jnp.power(val, exb)
    return (2.0 * jnp.pi * sigma).reshape(1, -1).astype(jnp.float32)


def _pe_column_permutation():
    """Map original 512 layout [cls | sin(tx) cos(tx) | ... | sin(a) cos(a)]
    to the kernel layout [cls | sin(tx..a) (224) | cos(tx..a) (224)]."""
    base = 64 + 64 * np.arange(7)[:, None]
    sin_cols = (base + np.arange(32)[None, :]).reshape(-1)
    cos_cols = (base + 32 + np.arange(32)[None, :]).reshape(-1)
    return np.concatenate([np.arange(64), sin_cols, cos_cols]).astype(np.int32)


def init_params(key, *, n_classes, feature_size, hidden_dims, mask_flat_dim):
    ks = jax.random.split(key, 8)
    scale = 0.02
    params = {
        # parameters declared by BaseAutoregressiveTransformer.__init__
        "start_token_embedding": jax.random.normal(ks[0], (1, 512), jnp.float32),  # unused in forward
        "w_class": scale * jax.random.normal(ks[1], (n_classes, 64), jnp.float32),        # fc_class (no bias)
        "w_room": scale * jax.random.normal(ks[2], (feature_size, 512), jnp.float32),     # fc_room_f
        "b_room": scale * jax.random.normal(ks[3], (512,), jnp.float32),
        "w_fc": scale * jax.random.normal(ks[4], (512, hidden_dims), jnp.float32),        # fc
        "b_fc": scale * jax.random.normal(ks[5], (hidden_dims,), jnp.float32),
        "sigma": fixed_pe_sigma(64, 0.1),                                                  # PE buffer (shared)
        # stand-in feature_extractor (external module): flatten + linear, zero bias
        "w_fe": scale * jax.random.normal(ks[6], (mask_flat_dim, feature_size), jnp.float32),
        "b_fe": jnp.zeros((feature_size,), jnp.float32),
    }
    # One-time (free) weight permutation so the kernel works in the lane-friendly
    # [cls | sin | cos] basis; numerically identical to the original layout.
    perm = _pe_column_permutation()
    params["w_room_perm"] = params["w_room"][:, perm]
    params["b_room_perm"] = params["b_room"][perm]
    params["w_fc_perm"] = params["w_fc"][perm, :]
    return params


def forward(params, class_labels, translations, sizes, angles, room_mask):
    """class_labels: [B,L,C], translations/sizes: [B,L,3], angles: [B,L,1],
       room_mask: [B,1,H,W] (NCHW).  Returns [B, L+1, hidden_dims]."""
    B, L, C = class_labels.shape
    H = params["w_fc_perm"].shape[1]

    # scalars broadcast against sigma host-side (tiny op) -> lane-dense [B*L, 224]
    scalars = jnp.concatenate([translations, sizes, angles], axis=-1)          # [B, L, 7]
    xs2d = (scalars[..., None] * params["sigma"].reshape(-1)).reshape(B * L, 7 * 32)
    cls2d = class_labels.reshape(B * L, C)
    mask2d = room_mask.reshape(B, -1)                                          # NCHW -> [B, C*H*W]

    tok_out, room_out = fused_forward(params, cls2d, xs2d, mask2d)
    tok_out = tok_out[:B * L].reshape(B, L, H)
    # Cheap final assembly: [room feature, box embeddings] along the sequence axis.
    return jnp.concatenate([room_out[:, None, :], tok_out], axis=1)


def reference(params, class_labels, translations, sizes, angles, room_mask):
    """Pure-JAX reference with the ORIGINAL (un-permuted) PyTorch layout."""
    B, L, C = class_labels.shape
    sigma = params["sigma"]
    scalars = jnp.concatenate([translations, sizes, angles], axis=-1)
    parts = [class_labels @ params["w_class"]]
    for k in range(7):
        x = scalars[..., k:k + 1] * sigma
        parts.append(jnp.concatenate([jnp.sin(x), jnp.cos(x)], axis=-1))
    tok = jnp.concatenate(parts, axis=-1)
    feat = room_mask.reshape(B, -1) @ params["w_fe"] + params["b_fe"]
    room_f = feat @ params["w_room"] + params["b_room"]
    X = jnp.concatenate([room_f[:, None, :], tok], axis=1)
    return X @ params["w_fc"] + params["b_fc"]


if __name__ == "__main__":
    # small shapes consistent with the module
    B, L = 2, 7
    input_dims = 30
    n_classes = input_dims - 3 - 3 - 1          # 23
    feature_size = 128
    hidden_dims = 256                           # config.get('hidden_dims', ...)
    Hm = Wm = 16

    key = jax.random.PRNGKey(0)
    kp, k1, k2, k3, k4, k5 = jax.random.split(key, 6)
    params = init_params(kp, n_classes=n_classes, feature_size=feature_size,
                         hidden_dims=hidden_dims, mask_flat_dim=1 * Hm * Wm)

    class_labels = jax.nn.one_hot(
        jax.random.randint(k1, (B, L), 0, n_classes), n_classes, dtype=jnp.float32)
    translations = jax.random.normal(k2, (B, L, 3), jnp.float32)
    sizes = jax.random.uniform(k3, (B, L, 3), jnp.float32)
    angles = jax.random.uniform(k4, (B, L, 1), jnp.float32, -np.pi, np.pi)
    room_mask = (jax.random.uniform(k5, (B, 1, Hm, Wm), jnp.float32) > 0.5).astype(jnp.float32)

    out = forward(params, class_labels, translations, sizes, angles, room_mask)
    out = jax.block_until_ready(out)

    ref = reference(params, class_labels, translations, sizes, angles, room_mask)
    assert out.shape == (B, L + 1, hidden_dims)
    assert np.allclose(np.asarray(out), np.asarray(ref), rtol=2e-2, atol=2e-2)

    print("KERNEL_OK")
</pallas_src>

<mosaic_0001>
module attributes {stable_mosaic.version = 11 : i64} {
  func.func @_fused_forward_kernel(%arg0: i32, %arg1: memref<14x23xf32, #tpu.memory_space<vmem>>, %arg2: memref<14x224xf32, #tpu.memory_space<vmem>>, %arg3: memref<2x256xf32, #tpu.memory_space<vmem>>, %arg4: memref<23x64xf32, #tpu.memory_space<vmem>>, %arg5: memref<256x128xf32, #tpu.memory_space<vmem>>, %arg6: memref<1x128xf32, #tpu.memory_space<vmem>>, %arg7: memref<128x512xf32, #tpu.memory_space<vmem>>, %arg8: memref<1x512xf32, #tpu.memory_space<vmem>>, %arg9: memref<512x256xf32, #tpu.memory_space<vmem>>, %arg10: memref<1x256xf32, #tpu.memory_space<vmem>>, %arg11: memref<14x256xf32, #tpu.memory_space<vmem>>, %arg12: memref<2x256xf32, #tpu.memory_space<vmem>>) attributes {dimension_semantics = [#tpu.dimension_semantics<arbitrary>], iteration_bounds = array<i64: 1>, scalar_prefetch = 0 : i64, scratch_operands = 0 : i64, tpu.core_type = #tpu.core_type<tc>, window_params = [{transform_indices = @transform_0, window_bounds = array<i64: 14, 23>}, {transform_indices = @transform_1, window_bounds = array<i64: 14, 224>}, {pipeline_mode = #tpu.pipeline_mode<synchronous>, transform_indices = @transform_2, window_bounds = array<i64: 2, 256>}, {pipeline_mode = #tpu.pipeline_mode<synchronous>, transform_indices = @transform_3, window_bounds = array<i64: 23, 64>}, {pipeline_mode = #tpu.pipeline_mode<synchronous>, transform_indices = @transform_4, window_bounds = array<i64: 256, 128>}, {pipeline_mode = #tpu.pipeline_mode<synchronous>, transform_indices = @transform_5, window_bounds = array<i64: 1, 128>}, {pipeline_mode = #tpu.pipeline_mode<synchronous>, transform_indices = @transform_6, window_bounds = array<i64: 128, 512>}, {pipeline_mode = #tpu.pipeline_mode<synchronous>, transform_indices = @transform_7, window_bounds = array<i64: 1, 512>}, {pipeline_mode = #tpu.pipeline_mode<synchronous>, transform_indices = @transform_8, window_bounds = array<i64: 512, 256>}, {pipeline_mode = #tpu.pipeline_mode<synchronous>, transform_indices = @transform_9, window_bounds = array<i64: 1, 256>}, {transform_indices = @transform_10, window_bounds = array<i64: 14, 256>}, {pipeline_mode = #tpu.pipeline_mode<synchronous>, transform_indices = @transform_11, window_bounds = array<i64: 2, 256>}]} {
    %c0_i32 = arith.constant 0 : i32
    %0 = arith.cmpi eq, %arg0, %c0_i32 : i32
    %1 = arith.extui %0 : i1 to i32
    %c0_i32_0 = arith.constant 0 : i32
    %2 = arith.cmpi ne, %1, %c0_i32_0 : i32
    scf.if %2 {
      %c0_17 = arith.constant 0 : index
      %c0_18 = arith.constant 0 : index
      %21 = vector.load %arg3[%c0_17, %c0_18] : memref<2x256xf32, #tpu.memory_space<vmem>>, vector<2x256xf32>
      %c0_19 = arith.constant 0 : index
      %c0_20 = arith.constant 0 : index
      %22 = vector.load %arg5[%c0_19, %c0_20] : memref<256x128xf32, #tpu.memory_space<vmem>>, vector<256x128xf32>
      %cst_21 = arith.constant dense<0.000000e+00> : vector<2x128xf32>
      %23 = tpu.matmul %21, %22, %cst_21 {dimension_numbers = #tpu.dot_dimension_numbers<[1], [0], [0], [1], [0, 0, 1, 1], [], []>} : vector<2x256xf32>, vector<256x128xf32>, vector<2x128xf32> -> vector<2x128xf32>
      %c0_22 = arith.constant 0 : index
      %c0_23 = arith.constant 0 : index
      %24 = vector.load %arg6[%c0_22, %c0_23] : memref<1x128xf32, #tpu.memory_space<vmem>>, vector<1x128xf32>
      %25 = vector.broadcast %24 : vector<1x128xf32> to vector<2x128xf32>
      %26 = arith.addf %23, %25 : vector<2x128xf32>
      %c0_24 = arith.constant 0 : index
      %c0_25 = arith.constant 0 : index
      %27 = vector.load %arg7[%c0_24, %c0_25] : memref<128x512xf32, #tpu.memory_space<vmem>>, vector<128x512xf32>
      %cst_26 = arith.constant dense<0.000000e+00> : vector<2x512xf32>
      %28 = tpu.matmul %26, %27, %cst_26 {dimension_numbers = #tpu.dot_dimension_numbers<[1], [0], [0], [1], [0, 0, 1, 1], [], []>} : vector<2x128xf32>, vector<128x512xf32>, vector<2x512xf32> -> vector<2x512xf32>
      %c0_27 = arith.constant 0 : index
      %c0_28 = arith.constant 0 : index
      %29 = vector.load %arg8[%c0_27, %c0_28] : memref<1x512xf32, #tpu.memory_space<vmem>>, vector<1x512xf32>
      %30 = vector.broadcast %29 : vector<1x512xf32> to vector<2x512xf32>
      %31 = arith.addf %28, %30 : vector<2x512xf32>
      %c0_29 = arith.constant 0 : index
      %c0_30 = arith.constant 0 : index
      %32 = vector.load %arg9[%c0_29, %c0_30] : memref<512x256xf32, #tpu.memory_space<vmem>>, vector<512x256xf32>
      %cst_31 = arith.constant dense<0.000000e+00> : vector<2x256xf32>
      %33 = tpu.matmul %31, %32, %cst_31 {dimension_numbers = #tpu.dot_dimension_numbers<[1], [0], [0], [1], [0, 0, 1, 1], [], []>} : vector<2x512xf32>, vector<512x256xf32>, vector<2x256xf32> -> vector<2x256xf32>
      %c0_32 = arith.constant 0 : index
      %c0_33 = arith.constant 0 : index
      %34 = vector.load %arg10[%c0_32, %c0_33] : memref<1x256xf32, #tpu.memory_space<vmem>>, vector<1x256xf32>
      %35 = vector.broadcast %34 : vector<1x256xf32> to vector<2x256xf32>
      %36 = arith.addf %33, %35 : vector<2x256xf32>
      %c0_34 = arith.constant 0 : index
      %c0_35 = arith.constant 0 : index
      %37 = vector.load %arg12[%c0_34, %c0_35] : memref<2x256xf32, #tpu.memory_space<vmem>>, vector<2x256xf32>
      tpu.vector_store %arg12[%c0_34, %c0_35], %36 {strides = array<i32>} : memref<2x256xf32, #tpu.memory_space<vmem>>, vector<2x256xf32>,
    } else {
    }
    %c0 = arith.constant 0 : index
    %c0_1 = arith.constant 0 : index
    %3 = vector.load %arg1[%c0, %c0_1] : memref<14x23xf32, #tpu.memory_space<vmem>>, vector<14x23xf32>
    %c0_2 = arith.constant 0 : index
    %c0_3 = arith.constant 0 : index
    %4 = vector.load %arg4[%c0_2, %c0_3] : memref<23x64xf32, #tpu.memory_space<vmem>>, vector<23x64xf32>
    %cst = arith.constant dense<0.000000e+00> : vector<14x64xf32>
    %5 = tpu.matmul %3, %4, %cst {dimension_numbers = #tpu.dot_dimension_numbers<[1], [0], [0], [1], [0, 0, 1, 1], [], []>} : vector<14x23xf32>, vector<23x64xf32>, vector<14x64xf32> -> vector<14x64xf32>
    %c0_4 = arith.constant 0 : index
    %c0_5 = arith.constant 0 : index
    %6 = vector.load %arg2[%c0_4, %c0_5] : memref<14x224xf32, #tpu.memory_space<vmem>>, vector<14x224xf32>
    %7 = math.sin %6 : vector<14x224xf32>
    %8 = math.cos %6 : vector<14x224xf32>
    %c0_6 = arith.constant 0 : index
    %c0_7 = arith.constant 0 : index
    %9 = vector.load %arg9[%c0_6, %c0_7] : memref<512x256xf32, #tpu.memory_space<vmem>>, vector<64x256xf32>
    %cst_8 = arith.constant dense<0.000000e+00> : vector<14x256xf32>
    %10 = tpu.matmul %5, %9, %cst_8 {dimension_numbers = #tpu.dot_dimension_numbers<[1], [0], [0], [1], [0, 0, 1, 1], [], []>} : vector<14x64xf32>, vector<64x256xf32>, vector<14x256xf32> -> vector<14x256xf32>
    %c64 = arith.constant 64 : index
    %c0_9 = arith.constant 0 : index
    %11 = vector.load %arg9[%c64, %c0_9] : memref<512x256xf32, #tpu.memory_space<vmem>>, vector<224x256xf32>
    %cst_10 = arith.constant dense<0.000000e+00> : vector<14x256xf32>
    %12 = tpu.matmul %7, %11, %cst_10 {dimension_numbers = #tpu.dot_dimension_numbers<[1], [0], [0], [1], [0, 0, 1, 1], [], []>} : vector<14x224xf32>, vector<224x256xf32>, vector<14x256xf32> -> vector<14x256xf32>
    %13 = arith.addf %10, %12 : vector<14x256xf32>
    %c288 = arith.constant 288 : index
    %c0_11 = arith.constant 0 : index
    %14 = vector.load %arg9[%c288, %c0_11] : memref<512x256xf32, #tpu.memory_space<vmem>>, vector<224x256xf32>
    %cst_12 = arith.constant dense<0.000000e+00> : vector<14x256xf32>
    %15 = tpu.matmul %8, %14, %cst_12 {dimension_numbers = #tpu.dot_dimension_numbers<[1], [0], [0], [1], [0, 0, 1, 1], [], []>} : vector<14x224xf32>, vector<224x256xf32>, vector<14x256xf32> -> vector<14x256xf32>
    %16 = arith.addf %13, %15 : vector<14x256xf32>
    %c0_13 = arith.constant 0 : index
    %c0_14 = arith.constant 0 : index
    %17 = vector.load %arg10[%c0_13, %c0_14] : memref<1x256xf32, #tpu.memory_space<vmem>>, vector<1x256xf32>
    %18 = vector.broadcast %17 : vector<1x256xf32> to vector<14x256xf32>
    %19 = arith.addf %16, %18 : vector<14x256xf32>
    %c0_15 = arith.constant 0 : index
    %c0_16 = arith.constant 0 : index
    %20 = vector.load %arg11[%c0_15, %c0_16] : memref<14x256xf32, #tpu.memory_space<vmem>>, vector<14x256xf32>
    tpu.vector_store %arg11[%c0_15, %c0_16], %19 {strides = array<i32>} : memref<14x256xf32, #tpu.memory_space<vmem>>, vector<14x256xf32>,
    return
  }
  func.func @transform_0(%arg0: i32) -> (i32, i32) {
    %c0_i32 = arith.constant 0 : i32
    %c0_i32_0 = arith.constant 0 : i32
    return %arg0, %c0_i32 : i32, i32
  }
  func.func @transform_1(%arg0: i32) -> (i32, i32) {
    %c0_i32 = arith.constant 0 : i32
    %c0_i32_0 = arith.constant 0 : i32
    return %arg0, %c0_i32 : i32, i32
  }
  func.func @transform_2(%arg0: i32) -> (i32, i32) {
    %c0_i32 = arith.constant 0 : i32
    %c0_i32_0 = arith.constant 0 : i32
    %c0_i32_1 = arith.constant 0 : i32
    return %c0_i32, %c0_i32_0 : i32, i32
  }
  func.func @transform_3(%arg0: i32) -> (i32, i32) {
    %c0_i32 = arith.constant 0 : i32
    %c0_i32_0 = arith.constant 0 : i32
    %c0_i32_1 = arith.constant 0 : i32
    return %c0_i32, %c0_i32_0 : i32, i32
  }
  func.func @transform_4(%arg0: i32) -> (i32, i32) {
    %c0_i32 = arith.constant 0 : i32
    %c0_i32_0 = arith.constant 0 : i32
    %c0_i32_1 = arith.constant 0 : i32
    return %c0_i32, %c0_i32_0 : i32, i32
  }
  func.func @transform_5(%arg0: i32) -> (i32, i32) {
    %c0_i32 = arith.constant 0 : i32
    %c0_i32_0 = arith.constant 0 : i32
    %c0_i32_1 = arith.constant 0 : i32
    return %c0_i32, %c0_i32_0 : i32, i32
  }
  func.func @transform_6(%arg0: i32) -> (i32, i32) {
    %c0_i32 = arith.constant 0 : i32
    %c0_i32_0 = arith.constant 0 : i32
    %c0_i32_1 = arith.constant 0 : i32
    return %c0_i32, %c0_i32_0 : i32, i32
  }
  func.func @transform_7(%arg0: i32) -> (i32, i32) {
    %c0_i32 = arith.constant 0 : i32
    %c0_i32_0 = arith.constant 0 : i32
    %c0_i32_1 = arith.constant 0 : i32
    return %c0_i32, %c0_i32_0 : i32, i32
  }
  func.func @transform_8(%arg0: i32) -> (i32, i32) {
    %c0_i32 = arith.constant 0 : i32
    %c0_i32_0 = arith.constant 0 : i32
    %c0_i32_1 = arith.constant 0 : i32
    return %c0_i32, %c0_i32_0 : i32, i32
  }
  func.func @transform_9(%arg0: i32) -> (i32, i32) {
    %c0_i32 = arith.constant 0 : i32
    %c0_i32_0 = arith.constant 0 : i32
    %c0_i32_1 = arith.constant 0 : i32
    return %c0_i32, %c0_i32_0 : i32, i32
  }
  func.func @transform_10(%arg0: i32) -> (i32, i32) {
    %c0_i32 = arith.constant 0 : i32
    %c0_i32_0 = arith.constant 0 : i32
    return %arg0, %c0_i32 : i32, i32
  }
  func.func @transform_11(%arg0: i32) -> (i32, i32) {
    %c0_i32 = arith.constant 0 : i32
    %c0_i32_0 = arith.constant 0 : i32
    %c0_i32_1 = arith.constant 0 : i32
    return %c0_i32, %c0_i32_0 : i32, i32
  }
}

</mosaic_0001>

<llo_original>
// kernel: tpu_custom_call.1
$region0: #{tpu_custom_call.1}
  #allocation0 [shape = 'u32[]', space=smem, size = 0x4, offset = 0x4, fixed_abs, tag = 'smem constant byte address 0x4 - core index']
  #allocation1 [shape = 'u32[72,128]{1,0:T(1,128)}', space=vmem, size = 0x9000, scoped, tag = 'internal scratch']
  %s0 = inlined_call_operand.hbm [shape: f32[14,23], index: 0, kind: input, shape index: {}]
  %s1 = inlined_call_operand.hbm [shape: f32[14,224], index: 1, kind: input, shape index: {}]
  %s2 = inlined_call_operand.hbm [shape: f32[2,256], index: 2, kind: input, shape index: {}]
  %s3 = inlined_call_operand.hbm [shape: f32[23,64], index: 3, kind: input, shape index: {}]
  %s4 = inlined_call_operand.hbm [shape: f32[256,128], index: 4, kind: input, shape index: {}]
  %s5 = inlined_call_operand.hbm [shape: f32[1,128], index: 5, kind: input, shape index: {}]
  %s6 = inlined_call_operand.hbm [shape: f32[128,512], index: 6, kind: input, shape index: {}]
  %s7 = inlined_call_operand.vmem [shape: f32[1,512], index: 7, kind: input, shape index: {}]
  %s8 = inlined_call_operand.hbm [shape: f32[512,256], index: 8, kind: input, shape index: {}]
  %s9 = inlined_call_operand.vmem [shape: f32[1,256], index: 9, kind: input, shape index: {}]
  %s10 = inlined_call_operand.hbm [shape: f32[14,256], index: 10, kind: output, shape index: {0}]
  %s11 = inlined_call_operand.hbm [shape: f32[2,256], index: 11, kind: output, shape index: {1}]
  %12 = xla_tuple %s10, %s11
  %s13 = sld [smem:[#allocation0]]
  $region94: #{tpu_custom_call.1} parent=0
    _
  %s15 = ssub.s32 1, %s13
  %s16 = scalar_select 0, %s15, %s13
  $region1: #{tpu_custom_call.1} parent=0
    #allocation2 [shape = 'u8[8192]{0}', space=vmem, size = 0x2000, scoped, tag = 'input window, operand 0, single buffered']
    #allocation3 [shape = 's32[1]{0}', space=sflag, size = 0x4, scoped, tag = 'scoped memory for tpu_custom_call.1']
    #allocation4 [shape = 's32[1]{0}', space=sflag, size = 0x4, scoped, tag = 'scoped memory for tpu_custom_call.1']
    #allocation5 [shape = 'u8[16384]{0}', space=vmem, size = 0x4000, scoped, tag = 'input window, operand 1, single buffered']
    #allocation6 [shape = 's32[1]{0}', space=sflag, size = 0x4, scoped, tag = 'scoped memory for tpu_custom_call.1']
    #allocation7 [shape = 'u8[2048]{0}', space=vmem, size = 0x800, scoped, tag = 'input window, operand 2, single buffered']
    #allocation8 [shape = 'u8[12288]{0}', space=vmem, size = 0x3000, scoped, tag = 'input window, operand 3, single buffered']
    #allocation9 [shape = 's32[1]{0}', space=sflag, size = 0x4, scoped, tag = 'scoped memory for tpu_custom_call.1']
    #allocation10 [shape = 'u8[131072]{0}', space=vmem, size = 0x20000, scoped, tag = 'input window, operand 4, single buffered']
    #allocation11 [shape = 'u8[512]{0}', space=vmem, size = 0x400, scoped, tag = 'input window, operand 5, single buffered']
    #allocation12 [shape = 's32[1]{0}', space=sflag, size = 0x4, scoped, tag = 'scoped memory for tpu_custom_call.1']
    #allocation13 [shape = 'u8[262144]{0}', space=vmem, size = 0x40000, scoped, tag = 'input window, operand 6, single buffered']
    #allocation14 [shape = 'u8[524288]{0}', space=vmem, size = 0x80000, scoped, tag = 'input window, operand 8, single buffered']
    #allocation15 [shape = 's32[1]{0}', space=sflag, size = 0x4, scoped, tag = 'scoped memory for tpu_custom_call.1']
    #allocation16 [shape = 'u8[16384]{0}', space=vmem, size = 0x4000, scoped, tag = 'output window, operand 0, single buffered']
    #allocation17 [shape = 'u8[2048]{0}', space=vmem, size = 0x800, scoped, tag = 'output window, operand 1, single buffered']
    #allocation18 [shape = 's32[1]{0}', space=sflag, size = 0x4, scoped, tag = 'scoped memory for tpu_custom_call.1']
    %17 = vsyncpa [#allocation3], 0
    %18 = vsyncpa [#allocation6], 0
    %19 = vsyncpa [#allocation9], 0
    %20 = vsyncpa [#allocation12], 0
    %21 = vsyncpa [#allocation15], 0
    %22 = vsyncpa [#allocation4], 0
    %23 = vsyncpa [#allocation18], 0
    // Predicated region
    $region2: #{tpu_custom_call.1} parent=1 // pred_check
      _
    $region3: #{tpu_custom_call.1} parent=1 // pred_check_branch
      %25 = sbr.rel (0) target = $region5
    $region4: #{tpu_custom_call.1} parent=1 // pred_region
      %27 = vsyncadd [#allocation3], 0
      %s28 = sshll.u32 %s0, 4
      %s29 = int_to_ptr.hbm [resolvable:$true] %s28
      %s30 = sshll.u32 [#allocation2], 4
      %s31 = int_to_ptr.vmem [resolvable:$true] %s30
      %36 = dma.hbm_to_vmem [thread:$0]  %s29, 256, %s31, [#allocation3], 128, 128, 8
    $region5: #{tpu_custom_call.1} parent=1 // pred_fallthru
      _
    // Predicated region
    $region6: #{tpu_custom_call.1} parent=1 // pred_check
      _
    $region7: #{tpu_custom_call.1} parent=1 // pred_check_branch
      %38 = sbr.rel (0) target = $region9
    $region8: #{tpu_custom_call.1} parent=1 // pred_region
      %40 = vsyncadd [#allocation6], 0
      %s41 = sshll.u32 %s1, 4
      %s42 = int_to_ptr.hbm [resolvable:$true] %s41
      %s43 = sshll.u32 [#allocation5], 4
      %s44 = int_to_ptr.vmem [resolvable:$true] %s43
      %49 = dma.hbm_to_vmem [thread:$0]  %s42, 512, %s44, [#allocation6], 256, 256, 16
    $region9: #{tpu_custom_call.1} parent=1 // pred_fallthru
      _
    // Predicated region
    $region10: #{tpu_custom_call.1} parent=1 // pred_check
      _
    $region11: #{tpu_custom_call.1} parent=1 // pred_check_branch
      %51 = sbr.rel (0) target = $region13
    $region12: #{tpu_custom_call.1} parent=1 // pred_region
      %53 = vsyncadd [#allocation6], 0
      %s55 = sshll.u32 %s2, 4
      %s56 = int_to_ptr.hbm [resolvable:$true] %s55
      %s57 = sshll.u32 [#allocation7], 4
      %s58 = int_to_ptr.vmem [resolvable:$true] %s57
      %60 = dma.hbm_to_vmem [thread:$0]  %s56, 64, %s58, [#allocation6]
    $region13: #{tpu_custom_call.1} parent=1 // pred_fallthru
      _
    // Predicated region
    $region14: #{tpu_custom_call.1} parent=1 // pred_check
      _
    $region15: #{tpu_custom_call.1} parent=1 // pred_check_branch
      %62 = sbr.rel (0) target = $region17
    $region16: #{tpu_custom_call.1} parent=1 // pred_region
      %64 = vsyncadd [#allocation9], 0
      %s65 = sshll.u32 %s3, 4
      %s66 = int_to_ptr.hbm [resolvable:$true] %s65
      %s67 = sshll.u32 [#allocation8], 4
      %s68 = int_to_ptr.vmem [resolvable:$true] %s67
      %73 = dma.hbm_to_vmem [thread:$0]  %s66, 384, %s68, [#allocation9], 128, 128, 8
    $region17: #{tpu_custom_call.1} parent=1 // pred_fallthru
      _
    // Predicated region
    $region18: #{tpu_custom_call.1} parent=1 // pred_check
      _
    $region19: #{tpu_custom_call.1} parent=1 // pred_check_branch
      %75 = sbr.rel (0) target = $region21
    $region20: #{tpu_custom_call.1} parent=1 // pred_region
      %77 = vsyncadd [#allocation9], 0
      %s78 = sshll.u32 %s4, 4
      %s79 = int_to_ptr.hbm [resolvable:$true] %s78
      %s80 = sshll.u32 [#allocation10], 4
      %s81 = int_to_ptr.vmem [resolvable:$true] %s80
      %86 = dma.hbm_to_vmem [thread:$0]  %s79, 4096, %s81, [#allocation9], 128, 128, 8
    $region21: #{tpu_custom_call.1} parent=1 // pred_fallthru
      _
    // Predicated region
    $region22: #{tpu_custom_call.1} parent=1 // pred_check
      _
    $region23: #{tpu_custom_call.1} parent=1 // pred_check_branch
      %88 = sbr.rel (0) target = $region25
    $region24: #{tpu_custom_call.1} parent=1 // pred_region
      %90 = vsyncadd [#allocation12], 0
      %s92 = sshll.u32 %s5, 4
      %s93 = int_to_ptr.hbm [resolvable:$true] %s92
      %s94 = sshll.u32 [#allocation11], 4
      %s95 = int_to_ptr.vmem [resolvable:$true] %s94
      %97 = dma.hbm_to_vmem [thread:$0]  %s93, 16, %s95, [#allocation12]
    $region25: #{tpu_custom_call.1} parent=1 // pred_fallthru
      _
    // Predicated region
    $region26: #{tpu_custom_call.1} parent=1 // pred_check
      _
    $region27: #{tpu_custom_call.1} parent=1 // pred_check_branch
      %99 = sbr.rel (0) target = $region29
    $region28: #{tpu_custom_call.1} parent=1 // pred_region
      %101 = vsyncadd [#allocation12], 0
      %s102 = sshll.u32 %s6, 4
      %s103 = int_to_ptr.hbm [resolvable:$true] %s102
      %s104 = sshll.u32 [#allocation13], 4
      %s105 = int_to_ptr.vmem [resolvable:$true] %s104
      %110 = dma.hbm_to_vmem [thread:$0]  %s103, 8192, %s105, [#allocation12], 512, 512, 32
    $region29: #{tpu_custom_call.1} parent=1 // pred_fallthru
      _
    // Predicated region
    $region30: #{tpu_custom_call.1} parent=1 // pred_check
      _
    $region31: #{tpu_custom_call.1} parent=1 // pred_check_branch
      %112 = sbr.rel (0) target = $region33
    $region32: #{tpu_custom_call.1} parent=1 // pred_region
      _
    $region33: #{tpu_custom_call.1} parent=1 // pred_fallthru
      _
    // Predicated region
    $region34: #{tpu_custom_call.1} parent=1 // pred_check
      _
    $region35: #{tpu_custom_call.1} parent=1 // pred_check_branch
      %114 = sbr.rel (0) target = $region37
    $region36: #{tpu_custom_call.1} parent=1 // pred_region
      %116 = vsyncadd [#allocation15], 0
      %s117 = sshll.u32 %s8, 4
      %s118 = int_to_ptr.hbm [resolvable:$true] %s117
      %s119 = sshll.u32 [#allocation14], 4
      %s120 = int_to_ptr.vmem [resolvable:$true] %s119
      %125 = dma.hbm_to_vmem [thread:$0]  %s118, 16384, %s120, [#allocation15], 256, 256, 16
    $region37: #{tpu_custom_call.1} parent=1 // pred_fallthru
      _
    // Predicated region
    $region38: #{tpu_custom_call.1} parent=1 // pred_check
      _
    $region39: #{tpu_custom_call.1} parent=1 // pred_check_branch
      %127 = sbr.rel (0) target = $region41
    $region40: #{tpu_custom_call.1} parent=1 // pred_region
      _
    $region41: #{tpu_custom_call.1} parent=1 // pred_fallthru
      _
    // Predicated region
    $region42: #{tpu_custom_call.1} parent=1 // pred_check
      _
    $region43: #{tpu_custom_call.1} parent=1 // pred_check_branch
      %129 = sbr.rel (0) target = $region45
    $region44: #{tpu_custom_call.1} parent=1 // pred_region
      %131 = dma.done [#allocation3], 256
    $region45: #{tpu_custom_call.1} parent=1 // pred_fallthru
      _
    // Predicated region
    $region46: #{tpu_custom_call.1} parent=1 // pred_check
      _
    $region47: #{tpu_custom_call.1} parent=1 // pred_check_branch
      %133 = sbr.rel (0) target = $region49
    $region48: #{tpu_custom_call.1} parent=1 // pred_region
      %135 = dma.done [#allocation6], 512
    $region49: #{tpu_custom_call.1} parent=1 // pred_fallthru
      _
    // Predicated region
    $region50: #{tpu_custom_call.1} parent=1 // pred_check
      _
    $region51: #{tpu_custom_call.1} parent=1 // pred_check_branch
      %137 = sbr.rel (0) target = $region53
    $region52: #{tpu_custom_call.1} parent=1 // pred_region
      %139 = dma.done [#allocation6], 64
    $region53: #{tpu_custom_call.1} parent=1 // pred_fallthru
      _
    // Predicated region
    $region54: #{tpu_custom_call.1} parent=1 // pred_check
      _
    $region55: #{tpu_custom_call.1} parent=1 // pred_check_branch
      %141 = sbr.rel (0) target = $region57
    $region56: #{tpu_custom_call.1} parent=1 // pred_region
      %143 = dma.done [#allocation9], 384
    $region57: #{tpu_custom_call.1} parent=1 // pred_fallthru
      _
    // Predicated region
    $region58: #{tpu_custom_call.1} parent=1 // pred_check
      _
    $region59: #{tpu_custom_call.1} parent=1 // pred_check_branch
      %145 = sbr.rel (0) target = $region61
    $region60: #{tpu_custom_call.1} parent=1 // pred_region
      %147 = dma.done [#allocation9], 4096
    $region61: #{tpu_custom_call.1} parent=1 // pred_fallthru
      _
    // Predicated region
    $region62: #{tpu_custom_call.1} parent=1 // pred_check
      _
    $region63: #{tpu_custom_call.1} parent=1 // pred_check_branch
      %149 = sbr.rel (0) target = $region65
    $region64: #{tpu_custom_call.1} parent=1 // pred_region
      %151 = dma.done [#allocation12], 16
    $region65: #{tpu_custom_call.1} parent=1 // pred_fallthru
      _
    // Predicated region
    $region66: #{tpu_custom_call.1} parent=1 // pred_check
      _
    $region67: #{tpu_custom_call.1} parent=1 // pred_check_branch
      %153 = sbr.rel (0) target = $region69
    $region68: #{tpu_custom_call.1} parent=1 // pred_region
      %155 = dma.done [#allocation12], 8192
    $region69: #{tpu_custom_call.1} parent=1 // pred_fallthru
      _
    // Predicated region
    $region70: #{tpu_custom_call.1} parent=1 // pred_check
      _
    $region71: #{tpu_custom_call.1} parent=1 // pred_check_branch
      %157 = sbr.rel (0) target = $region73
    $region72: #{tpu_custom_call.1} parent=1 // pred_region
      %159 = dma.done [#allocation15], 16384
    $region73: #{tpu_custom_call.1} parent=1 // pred_fallthru
      _
    %p160 = scmp.eq.s32.totalorder 0, 0
    // Predicated region
    $region74: #{tpu_custom_call.1} parent=1 // pred_check
      %p161 = pneg %p160
    $region75: #{tpu_custom_call.1} parent=1 // pred_check_branch
      %163 = sbr.rel (%p161) target = $region77
    $region76: #{tpu_custom_call.1} parent=1 // pred_region
      %v164 = vld [vmem:[#allocation7] sm:$0xf]
      %v165 = vld [vmem:[#allocation10] sm:$0xff]
      %v166 = vld [vmem:[#allocation10 + $0x8] sm:$0xff]
      %v167 = vld [vmem:[#allocation10 + $0x10] sm:$0xff]
      %v168 = vld [vmem:[#allocation10 + $0x18] sm:$0xff]
      %v169 = vld [vmem:[#allocation10 + $0x20] sm:$0xff]
      %v170 = vld [vmem:[#allocation10 + $0x28] sm:$0xff]
      %v171 = vld [vmem:[#allocation10 + $0x30] sm:$0xff]
      %v172 = vld [vmem:[#allocation10 + $0x38] sm:$0xff]
      %v173 = vld [vmem:[#allocation10 + $0x40] sm:$0xff]
      %v174 = vld [vmem:[#allocation10 + $0x48] sm:$0xff]
      %v175 = vld [vmem:[#allocation10 + $0x50] sm:$0xff]
      %v176 = vld [vmem:[#allocation10 + $0x58] sm:$0xff]
      %v177 = vld [vmem:[#allocation10 + $0x60] sm:$0xff]
      %v178 = vld [vmem:[#allocation10 + $0x68] sm:$0xff]
      %v179 = vld [vmem:[#allocation10 + $0x70] sm:$0xff]
      %v180 = vld [vmem:[#allocation10 + $0x78] sm:$0xff]
      %v181 = vld [vmem:[#allocation10 + $0x80] sm:$0xff]
      %v182 = vld [vmem:[#allocation10 + $0x88] sm:$0xff]
      %v183 = vld [vmem:[#allocation10 + $0x90] sm:$0xff]
      %v184 = vld [vmem:[#allocation10 + $0x98] sm:$0xff]
      %v185 = vld [vmem:[#allocation10 + $0xa0] sm:$0xff]
      %v186 = vld [vmem:[#allocation10 + $0xa8] sm:$0xff]
      %v187 = vld [vmem:[#allocation10 + $0xb0] sm:$0xff]
      %v188 = vld [vmem:[#allocation10 + $0xb8] sm:$0xff]
      %v189 = vld [vmem:[#allocation10 + $0xc0] sm:$0xff]
      %v190 = vld [vmem:[#allocation10 + $0xc8] sm:$0xff]
      %v191 = vld [vmem:[#allocation10 + $0xd0] sm:$0xff]
      %v192 = vld [vmem:[#allocation10 + $0xd8] sm:$0xff]
      %v193 = vld [vmem:[#allocation10 + $0xe0] sm:$0xff]
      %v194 = vld [vmem:[#allocation10 + $0xe8] sm:$0xff]
      %v195 = vld [vmem:[#allocation10 + $0xf0] sm:$0xff]
      %v196 = vld [vmem:[#allocation10 + $0xf8] sm:$0xff]
      %v197 = vld [vmem:[#allocation11] sm:$0x1]
      %v199 = vperm.slane %v197, 0
      %202 = vst [vmem:[#allocation1] ss:$4 sm:$0xff] %v164
      %v203 = vld.sshfl [vmem:[#allocation1] sm:$0xff pattern:$0x73625140]
      %v204 = vld.sshfl [vmem:[#allocation1 + $0x8] sm:$0xff pattern:$0x73625140]
      %207 = vmatpush.msra.mxu0 %v180
      %208 = vmatpush.msra.mxu0 %v179
      %209 = vmatpush.msra.mxu0 %v178
      %210 = vmatpush.msra.mxu0 %v177
      %211 = vmatpush.msra.mxu0 %v176
      %212 = vmatpush.msra.mxu0 %v175
      %213 = vmatpush.msra.mxu0 %v174
      %214 = vmatpush.msra.mxu0 %v173
      %215 = vmatpush.msra.mxu0 %v172
      %216 = vmatpush.msra.mxu0 %v171
      %217 = vmatpush.msra.mxu0 %v170
      %218 = vmatpush.msra.mxu0 %v169
      %219 = vmatpush.msra.mxu0 %v168
      %220 = vmatpush.msra.mxu0 %v167
      %221 = vmatpush.msra.mxu0 %v166
      %222 = vmatpush.msra.mxu0 %v165
      %223 = vmatmul.f32.gmra.mxu0 %v203
      %v224 = vpop.f32.mrf.mxu0
      %v225 = vadd.f32 %v199, %v224
      %226 = vdwg.mxu0
      %227 = vmatpush.msra.mxu0 %v196
      %228 = vmatpush.msra.mxu0 %v195
      %229 = vmatpush.msra.mxu0 %v194
      %230 = vmatpush.msra.mxu0 %v193
      %231 = vmatpush.msra.mxu0 %v192
      %232 = vmatpush.msra.mxu0 %v191
      %233 = vmatpush.msra.mxu0 %v190
      %234 = vmatpush.msra.mxu0 %v189
      %235 = vmatpush.msra.mxu0 %v188
      %236 = vmatpush.msra.mxu0 %v187
      %237 = vmatpush.msra.mxu0 %v186
      %238 = vmatpush.msra.mxu0 %v185
      %239 = vmatpush.msra.mxu0 %v184
      %240 = vmatpush.msra.mxu0 %v183
      %241 = vmatpush.msra.mxu0 %v182
      %242 = vmatpush.msra.mxu0 %v181
      %243 = vmatmul.f32.gmra.mxu0 %v204
      %v244 = vpop.f32.mrf.mxu0
      %v245 = vadd.f32 %v225, %v244
      %246 = vdwg.mxu0
      %v247 = vld [vmem:[#allocation13] sm:$0xff]
      %v248 = vld [vmem:[#allocation13 + $0x8] sm:$0xff]
      %v249 = vld [vmem:[#allocation13 + $0x10] sm:$0xff]
      %v250 = vld [vmem:[#allocation13 + $0x18] sm:$0xff]
      %v251 = vld [vmem:[#allocation13 + $0x20] sm:$0xff]
      %v252 = vld [vmem:[#allocation13 + $0x28] sm:$0xff]
      %v253 = vld [vmem:[#allocation13 + $0x30] sm:$0xff]
      %v254 = vld [vmem:[#allocation13 + $0x38] sm:$0xff]
      %v255 = vld [vmem:[#allocation13 + $0x40] sm:$0xff]
      %v256 = vld [vmem:[#allocation13 + $0x48] sm:$0xff]
      %v257 = vld [vmem:[#allocation13 + $0x50] sm:$0xff]
      %v258 = vld [vmem:[#allocation13 + $0x58] sm:$0xff]
      %v259 = vld [vmem:[#allocation13 + $0x60] sm:$0xff]
      %v260 = vld [vmem:[#allocation13 + $0x68] sm:$0xff]
      %v261 = vld [vmem:[#allocation13 + $0x70] sm:$0xff]
      %v262 = vld [vmem:[#allocation13 + $0x78] sm:$0xff]
      %v263 = vld [vmem:[#allocation13 + $0x80] sm:$0xff]
      %v264 = vld [vmem:[#allocation13 + $0x88] sm:$0xff]
      %v265 = vld [vmem:[#allocation13 + $0x90] sm:$0xff]
      %v266 = vld [vmem:[#allocation13 + $0x98] sm:$0xff]
      %v267 = vld [vmem:[#allocation13 + $0xa0] sm:$0xff]
      %v268 = vld [vmem:[#allocation13 + $0xa8] sm:$0xff]
      %v269 = vld [vmem:[#allocation13 + $0xb0] sm:$0xff]
      %v270 = vld [vmem:[#allocation13 + $0xb8] sm:$0xff]
      %v271 = vld [vmem:[#allocation13 + $0xc0] sm:$0xff]
      %v272 = vld [vmem:[#allocation13 + $0xc8] sm:$0xff]
      %v273 = vld [vmem:[#allocation13 + $0xd0] sm:$0xff]
      %v274 = vld [vmem:[#allocation13 + $0xd8] sm:$0xff]
      %v275 = vld [vmem:[#allocation13 + $0xe0] sm:$0xff]
      %v276 = vld [vmem:[#allocation13 + $0xe8] sm:$0xff]
      %v277 = vld [vmem:[#allocation13 + $0xf0] sm:$0xff]
      %v278 = vld [vmem:[#allocation13 + $0xf8] sm:$0xff]
      %v279 = vld [vmem:[#allocation13 + $0x100] sm:$0xff]
      %v280 = vld [vmem:[#allocation13 + $0x108] sm:$0xff]
      %v281 = vld [vmem:[#allocation13 + $0x110] sm:$0xff]
      %v282 = vld [vmem:[#allocation13 + $0x118] sm:$0xff]
      %v283 = vld [vmem:[#allocation13 + $0x120] sm:$0xff]
      %v284 = vld [vmem:[#allocation13 + $0x128] sm:$0xff]
      %v285 = vld [vmem:[#allocation13 + $0x130] sm:$0xff]
      %v286 = vld [vmem:[#allocation13 + $0x138] sm:$0xff]
      %v287 = vld [vmem:[#allocation13 + $0x140] sm:$0xff]
      %v288 = vld [vmem:[#allocation13 + $0x148] sm:$0xff]
      %v289 = vld [vmem:[#allocation13 + $0x150] sm:$0xff]
      %v290 = vld [vmem:[#allocation13 + $0x158] sm:$0xff]
      %v291 = vld [vmem:[#allocation13 + $0x160] sm:$0xff]
      %v292 = vld [vmem:[#allocation13 + $0x168] sm:$0xff]
      %v293 = vld [vmem:[#allocation13 + $0x170] sm:$0xff]
      %v294 = vld [vmem:[#allocation13 + $0x178] sm:$0xff]
      %v295 = vld [vmem:[#allocation13 + $0x180] sm:$0xff]
      %v296 = vld [vmem:[#allocation13 + $0x188] sm:$0xff]
      %v297 = vld [vmem:[#allocation13 + $0x190] sm:$0xff]
      %v298 = vld [vmem:[#allocation13 + $0x198] sm:$0xff]
      %v299 = vld [vmem:[#allocation13 + $0x1a0] sm:$0xff]
      %v300 = vld [vmem:[#allocation13 + $0x1a8] sm:$0xff]
      %v301 = vld [vmem:[#allocation13 + $0x1b0] sm:$0xff]
      %v302 = vld [vmem:[#allocation13 + $0x1b8] sm:$0xff]
      %v303 = vld [vmem:[#allocation13 + $0x1c0] sm:$0xff]
      %v304 = vld [vmem:[#allocation13 + $0x1c8] sm:$0xff]
      %v305 = vld [vmem:[#allocation13 + $0x1d0] sm:$0xff]
      %v306 = vld [vmem:[#allocation13 + $0x1d8] sm:$0xff]
      %v307 = vld [vmem:[#allocation13 + $0x1e0] sm:$0xff]
      %v308 = vld [vmem:[#allocation13 + $0x1e8] sm:$0xff]
      %v309 = vld [vmem:[#allocation13 + $0x1f0] sm:$0xff]
      %v310 = vld [vmem:[#allocation13 + $0x1f8] sm:$0xff]
      %v311 = vld [vmem:[%s7] sm:$0xf]
      %v313 = vperm.slane %v311, 0
      %v314 = vperm.slane %v311, 1
      %v315 = vperm.slane %v311, 2
      %v316 = vperm.slane %v311, 3
      %321 = vmatpush.msra.mxu0 %v307
      %322 = vmatpush.msra.mxu0 %v303
      %323 = vmatpush.msra.mxu0 %v299
      %324 = vmatpush.msra.mxu0 %v295
      %325 = vmatpush.msra.mxu0 %v291
      %326 = vmatpush.msra.mxu0 %v287
      %327 = vmatpush.msra.mxu0 %v283
      %328 = vmatpush.msra.mxu0 %v279
      %329 = vmatpush.msra.mxu0 %v275
      %330 = vmatpush.msra.mxu0 %v271
      %331 = vmatpush.msra.mxu0 %v267
      %332 = vmatpush.msra.mxu0 %v263
      %333 = vmatpush.msra.mxu0 %v259
      %334 = vmatpush.msra.mxu0 %v255
      %335 = vmatpush.msra.mxu0 %v251
      %336 = vmatpush.msra.mxu0 %v247
      %337 = vmatmul.f32.gmra.mxu0 %v245
      %v338 = vpop.f32.mrf.mxu0
      %v339 = vadd.f32 %v313, %v338
      %340 = vdwg.mxu0
      %341 = vmatpush.msra.mxu0 %v308
      %342 = vmatpush.msra.mxu0 %v304
      %343 = vmatpush.msra.mxu0 %v300
      %344 = vmatpush.msra.mxu0 %v296
      %345 = vmatpush.msra.mxu0 %v292
      %346 = vmatpush.msra.mxu0 %v288
      %347 = vmatpush.msra.mxu0 %v284
      %348 = vmatpush.msra.mxu0 %v280
      %349 = vmatpush.msra.mxu0 %v276
      %350 = vmatpush.msra.mxu0 %v272
      %351 = vmatpush.msra.mxu0 %v268
      %352 = vmatpush.msra.mxu0 %v264
      %353 = vmatpush.msra.mxu0 %v260
      %354 = vmatpush.msra.mxu0 %v256
      %355 = vmatpush.msra.mxu0 %v252
      %356 = vmatpush.msra.mxu0 %v248
      %357 = vmatmul.f32.gmra.mxu0 %v245
      %v358 = vpop.f32.mrf.mxu0
      %v359 = vadd.f32 %v314, %v358
      %360 = vdwg.mxu0
      %361 = vmatpush.msra.mxu0 %v309
      %362 = vmatpush.msra.mxu0 %v305
      %363 = vmatpush.msra.mxu0 %v301
      %364 = vmatpush.msra.mxu0 %v297
      %365 = vmatpush.msra.mxu0 %v293
      %366 = vmatpush.msra.mxu0 %v289
      %367 = vmatpush.msra.mxu0 %v285
      %368 = vmatpush.msra.mxu0 %v281
      %369 = vmatpush.msra.mxu0 %v277
      %370 = vmatpush.msra.mxu0 %v273
      %371 = vmatpush.msra.mxu0 %v269
      %372 = vmatpush.msra.mxu0 %v265
      %373 = vmatpush.msra.mxu0 %v261
      %374 = vmatpush.msra.mxu0 %v257
      %375 = vmatpush.msra.mxu0 %v253
      %376 = vmatpush.msra.mxu0 %v249
      %377 = vmatmul.f32.gmra.mxu0 %v245
      %v378 = vpop.f32.mrf.mxu0
      %v379 = vadd.f32 %v315, %v378
      %380 = vdwg.mxu0
      %381 = vmatpush.msra.mxu0 %v310
      %382 = vmatpush.msra.mxu0 %v306
      %383 = vmatpush.msra.mxu0 %v302
      %384 = vmatpush.msra.mxu0 %v298
      %385 = vmatpush.msra.mxu0 %v294
      %386 = vmatpush.msra.mxu0 %v290
      %387 = vmatpush.msra.mxu0 %v286
      %388 = vmatpush.msra.mxu0 %v282
      %389 = vmatpush.msra.mxu0 %v278
      %390 = vmatpush.msra.mxu0 %v274
      %391 = vmatpush.msra.mxu0 %v270
      %392 = vmatpush.msra.mxu0 %v266
      %393 = vmatpush.msra.mxu0 %v262
      %394 = vmatpush.msra.mxu0 %v258
      %395 = vmatpush.msra.mxu0 %v254
      %396 = vmatpush.msra.mxu0 %v250
      %397 = vmatmul.f32.gmra.mxu0 %v245
      %v398 = vpop.f32.mrf.mxu0
      %v399 = vadd.f32 %v316, %v398
      %400 = vdwg.mxu0
      %v401 = vld [vmem:[#allocation14] sm:$0xff]
      %v402 = vld [vmem:[#allocation14 + $0x8] sm:$0xff]
      %v403 = vld [vmem:[#allocation14 + $0x10] sm:$0xff]
      %v404 = vld [vmem:[#allocation14 + $0x18] sm:$0xff]
      %v405 = vld [vmem:[#allocation14 + $0x20] sm:$0xff]
      %v406 = vld [vmem:[#allocation14 + $0x28] sm:$0xff]
      %v407 = vld [vmem:[#allocation14 + $0x30] sm:$0xff]
      %v408 = vld [vmem:[#allocation14 + $0x38] sm:$0xff]
      %v409 = vld [vmem:[#allocation14 + $0x40] sm:$0xff]
      %v410 = vld [vmem:[#allocation14 + $0x48] sm:$0xff]
      %v411 = vld [vmem:[#allocation14 + $0x50] sm:$0xff]
      %v412 = vld [vmem:[#allocation14 + $0x58] sm:$0xff]
      %v413 = vld [vmem:[#allocation14 + $0x60] sm:$0xff]
      %v414 = vld [vmem:[#allocation14 + $0x68] sm:$0xff]
      %v415 = vld [vmem:[#allocation14 + $0x70] sm:$0xff]
      %v416 = vld [vmem:[#allocation14 + $0x78] sm:$0xff]
      %v417 = vld [vmem:[#allocation14 + $0x80] sm:$0xff]
      %v418 = vld [vmem:[#allocation14 + $0x88] sm:$0xff]
      %v419 = vld [vmem:[#allocation14 + $0x90] sm:$0xff]
      %v420 = vld [vmem:[#allocation14 + $0x98] sm:$0xff]
      %v421 = vld [vmem:[#allocation14 + $0xa0] sm:$0xff]
      %v422 = vld [vmem:[#allocation14 + $0xa8] sm:$0xff]
      %v423 = vld [vmem:[#allocation14 + $0xb0] sm:$0xff]
      %v424 = vld [vmem:[#allocation14 + $0xb8] sm:$0xff]
      %v425 = vld [vmem:[#allocation14 + $0xc0] sm:$0xff]
      %v426 = vld [vmem:[#allocation14 + $0xc8] sm:$0xff]
      %v427 = vld [vmem:[#allocation14 + $0xd0] sm:$0xff]
      %v428 = vld [vmem:[#allocation14 + $0xd8] sm:$0xff]
      %v429 = vld [vmem:[#allocation14 + $0xe0] sm:$0xff]
      %v430 = vld [vmem:[#allocation14 + $0xe8] sm:$0xff]
      %v431 = vld [vmem:[#allocation14 + $0xf0] sm:$0xff]
      %v432 = vld [vmem:[#allocation14 + $0xf8] sm:$0xff]
      %v433 = vld [vmem:[#allocation14 + $0x100] sm:$0xff]
      %v434 = vld [vmem:[#allocation14 + $0x108] sm:$0xff]
      %v435 = vld [vmem:[#allocation14 + $0x110] sm:$0xff]
      %v436 = vld [vmem:[#allocation14 + $0x118] sm:$0xff]
      %v437 = vld [vmem:[#allocation14 + $0x120] sm:$0xff]
      %v438 = vld [vmem:[#allocation14 + $0x128] sm:$0xff]
      %v439 = vld [vmem:[#allocation14 + $0x130] sm:$0xff]
      %v440 = vld [vmem:[#allocation14 + $0x138] sm:$0xff]
      %v441 = vld [vmem:[#allocation14 + $0x140] sm:$0xff]
      %v442 = vld [vmem:[#allocation14 + $0x148] sm:$0xff]
      %v443 = vld [vmem:[#allocation14 + $0x150] sm:$0xff]
      %v444 = vld [vmem:[#allocation14 + $0x158] sm:$0xff]
      %v445 = vld [vmem:[#allocation14 + $0x160] sm:$0xff]
      %v446 = vld [vmem:[#allocation14 + $0x168] sm:$0xff]
      %v447 = vld [vmem:[#allocation14 + $0x170] sm:$0xff]
      %v448 = vld [vmem:[#allocation14 + $0x178] sm:$0xff]
      %v449 = vld [vmem:[#allocation14 + $0x180] sm:$0xff]
      %v450 = vld [vmem:[#allocation14 + $0x188] sm:$0xff]
      %v451 = vld [vmem:[#allocation14 + $0x190] sm:$0xff]
      %v452 = vld [vmem:[#allocation14 + $0x198] sm:$0xff]
      %v453 = vld [vmem:[#allocation14 + $0x1a0] sm:$0xff]
      %v454 = vld [vmem:[#allocation14 + $0x1a8] sm:$0xff]
      %v455 = vld [vmem:[#allocation14 + $0x1b0] sm:$0xff]
      %v456 = vld [vmem:[#allocation14 + $0x1b8] sm:$0xff]
      %v457 = vld [vmem:[#allocation14 + $0x1c0] sm:$0xff]
      %v458 = vld [vmem:[#allocation14 + $0x1c8] sm:$0xff]
      %v459 = vld [vmem:[#allocation14 + $0x1d0] sm:$0xff]
      %v460 = vld [vmem:[#allocation14 + $0x1d8] sm:$0xff]
      %v461 = vld [vmem:[#allocation14 + $0x1e0] sm:$0xff]
      %v462 = vld [vmem:[#allocation14 + $0x1e8] sm:$0xff]
      %v463 = vld [vmem:[#allocation14 + $0x1f0] sm:$0xff]
      %v464 = vld [vmem:[#allocation14 + $0x1f8] sm:$0xff]
      %v465 = vld [vmem:[#allocation14 + $0x200] sm:$0xff]
      %v466 = vld [vmem:[#allocation14 + $0x208] sm:$0xff]
      %v467 = vld [vmem:[#allocation14 + $0x210] sm:$0xff]
      %v468 = vld [vmem:[#allocation14 + $0x218] sm:$0xff]
      %v469 = vld [vmem:[#allocation14 + $0x220] sm:$0xff]
      %v470 = vld [vmem:[#allocation14 + $0x228] sm:$0xff]
      %v471 = vld [vmem:[#allocation14 + $0x230] sm:$0xff]
      %v472 = vld [vmem:[#allocation14 + $0x238] sm:$0xff]
      %v473 = vld [vmem:[#allocation14 + $0x240] sm:$0xff]
      %v474 = vld [vmem:[#allocation14 + $0x248] sm:$0xff]
      %v475 = vld [vmem:[#allocation14 + $0x250] sm:$0xff]
      %v476 = vld [vmem:[#allocation14 + $0x258] sm:$0xff]
      %v477 = vld [vmem:[#allocation14 + $0x260] sm:$0xff]
      %v478 = vld [vmem:[#allocation14 + $0x268] sm:$0xff]
      %v479 = vld [vmem:[#allocation14 + $0x270] sm:$0xff]
      %v480 = vld [vmem:[#allocation14 + $0x278] sm:$0xff]
      %v481 = vld [vmem:[#allocation14 + $0x280] sm:$0xff]
      %v482 = vld [vmem:[#allocation14 + $0x288] sm:$0xff]
      %v483 = vld [vmem:[#allocation14 + $0x290] sm:$0xff]
      %v484 = vld [vmem:[#allocation14 + $0x298] sm:$0xff]
      %v485 = vld [vmem:[#allocation14 + $0x2a0] sm:$0xff]
      %v486 = vld [vmem:[#allocation14 + $0x2a8] sm:$0xff]
      %v487 = vld [vmem:[#allocation14 + $0x2b0] sm:$0xff]
      %v488 = vld [vmem:[#allocation14 + $0x2b8] sm:$0xff]
      %v489 = vld [vmem:[#allocation14 + $0x2c0] sm:$0xff]
      %v490 = vld [vmem:[#allocation14 + $0x2c8] sm:$0xff]
      %v491 = vld [vmem:[#allocation14 + $0x2d0] sm:$0xff]
      %v492 = vld [vmem:[#allocation14 + $0x2d8] sm:$0xff]
      %v493 = vld [vmem:[#allocation14 + $0x2e0] sm:$0xff]
      %v494 = vld [vmem:[#allocation14 + $0x2e8] sm:$0xff]
      %v495 = vld [vmem:[#allocation14 + $0x2f0] sm:$0xff]
      %v496 = vld [vmem:[#allocation14 + $0x2f8] sm:$0xff]
      %v497 = vld [vmem:[#allocation14 + $0x300] sm:$0xff]
      %v498 = vld [vmem:[#allocation14 + $0x308] sm:$0xff]
      %v499 = vld [vmem:[#allocation14 + $0x310] sm:$0xff]
      %v500 = vld [vmem:[#allocation14 + $0x318] sm:$0xff]
      %v501 = vld [vmem:[#allocation14 + $0x320] sm:$0xff]
      %v502 = vld [vmem:[#allocation14 + $0x328] sm:$0xff]
      %v503 = vld [vmem:[#allocation14 + $0x330] sm:$0xff]
      %v504 = vld [vmem:[#allocation14 + $0x338] sm:$0xff]
      %v505 = vld [vmem:[#allocation14 + $0x340] sm:$0xff]
      %v506 = vld [vmem:[#allocation14 + $0x348] sm:$0xff]
      %v507 = vld [vmem:[#allocation14 + $0x350] sm:$0xff]
      %v508 = vld [vmem:[#allocation14 + $0x358] sm:$0xff]
      %v509 = vld [vmem:[#allocation14 + $0x360] sm:$0xff]
      %v510 = vld [vmem:[#allocation14 + $0x368] sm:$0xff]
      %v511 = vld [vmem:[#allocation14 + $0x370] sm:$0xff]
      %v512 = vld [vmem:[#allocation14 + $0x378] sm:$0xff]
      %v513 = vld [vmem:[#allocation14 + $0x380] sm:$0xff]
      %v514 = vld [vmem:[#allocation14 + $0x388] sm:$0xff]
      %v515 = vld [vmem:[#allocation14 + $0x390] sm:$0xff]
      %v516 = vld [vmem:[#allocation14 + $0x398] sm:$0xff]
      %v517 = vld [vmem:[#allocation14 + $0x3a0] sm:$0xff]
      %v518 = vld [vmem:[#allocation14 + $0x3a8] sm:$0xff]
      %v519 = vld [vmem:[#allocation14 + $0x3b0] sm:$0xff]
      %v520 = vld [vmem:[#allocation14 + $0x3b8] sm:$0xff]
      %v521 = vld [vmem:[#allocation14 + $0x3c0] sm:$0xff]
      %v522 = vld [vmem:[#allocation14 + $0x3c8] sm:$0xff]
      %v523 = vld [vmem:[#allocation14 + $0x3d0] sm:$0xff]
      %v524 = vld [vmem:[#allocation14 + $0x3d8] sm:$0xff]
      %v525 = vld [vmem:[#allocation14 + $0x3e0] sm:$0xff]
      %v526 = vld [vmem:[#allocation14 + $0x3e8] sm:$0xff]
      %v527 = vld [vmem:[#allocation14 + $0x3f0] sm:$0xff]
      %v528 = vld [vmem:[#allocation14 + $0x3f8] sm:$0xff]
      %v529 = vld [vmem:[%s9] sm:$0x3]
      %v531 = vperm.slane %v529, 0
      %v532 = vperm.slane %v529, 1
      %535 = vmatpush.msra.mxu0 %v431
      %536 = vmatpush.msra.mxu0 %v429
      %537 = vmatpush.msra.mxu0 %v427
      %538 = vmatpush.msra.mxu0 %v425
      %539 = vmatpush.msra.mxu0 %v423
      %540 = vmatpush.msra.mxu0 %v421
      %541 = vmatpush.msra.mxu0 %v419
      %542 = vmatpush.msra.mxu0 %v417
      %543 = vmatpush.msra.mxu0 %v415
      %544 = vmatpush.msra.mxu0 %v413
      %545 = vmatpush.msra.mxu0 %v411
      %546 = vmatpush.msra.mxu0 %v409
      %547 = vmatpush.msra.mxu0 %v407
      %548 = vmatpush.msra.mxu0 %v405
      %549 = vmatpush.msra.mxu0 %v403
      %550 = vmatpush.msra.mxu0 %v401
      %551 = vmatmul.f32.gmra.mxu0 %v339
      %v552 = vpop.f32.mrf.mxu0
      %v553 = vadd.f32 %v531, %v552
      %554 = vdwg.mxu0
      %555 = vmatpush.msra.mxu0 %v463
      %556 = vmatpush.msra.mxu0 %v461
      %557 = vmatpush.msra.mxu0 %v459
      %558 = vmatpush.msra.mxu0 %v457
      %559 = vmatpush.msra.mxu0 %v455
      %560 = vmatpush.msra.mxu0 %v453
      %561 = vmatpush.msra.mxu0 %v451
      %562 = vmatpush.msra.mxu0 %v449
      %563 = vmatpush.msra.mxu0 %v447
      %564 = vmatpush.msra.mxu0 %v445
      %565 = vmatpush.msra.mxu0 %v443
      %566 = vmatpush.msra.mxu0 %v441
      %567 = vmatpush.msra.mxu0 %v439
      %568 = vmatpush.msra.mxu0 %v437
      %569 = vmatpush.msra.mxu0 %v435
      %570 = vmatpush.msra.mxu0 %v433
      %571 = vmatmul.f32.gmra.mxu0 %v359
      %v572 = vpop.f32.mrf.mxu0
      %v573 = vadd.f32 %v553, %v572
      %574 = vdwg.mxu0
      %575 = vmatpush.msra.mxu0 %v495
      %576 = vmatpush.msra.mxu0 %v493
      %577 = vmatpush.msra.mxu0 %v491
      %578 = vmatpush.msra.mxu0 %v489
      %579 = vmatpush.msra.mxu0 %v487
      %580 = vmatpush.msra.mxu0 %v485
      %581 = vmatpush.msra.mxu0 %v483
      %582 = vmatpush.msra.mxu0 %v481
      %583 = vmatpush.msra.mxu0 %v479
      %584 = vmatpush.msra.mxu0 %v477
      %585 = vmatpush.msra.mxu0 %v475
      %586 = vmatpush.msra.mxu0 %v473
      %587 = vmatpush.msra.mxu0 %v471
      %588 = vmatpush.msra.mxu0 %v469
      %589 = vmatpush.msra.mxu0 %v467
      %590 = vmatpush.msra.mxu0 %v465
      %591 = vmatmul.f32.gmra.mxu0 %v379
      %v592 = vpop.f32.mrf.mxu0
      %v593 = vadd.f32 %v573, %v592
      %594 = vdwg.mxu0
      %595 = vmatpush.msra.mxu0 %v527
      %596 = vmatpush.msra.mxu0 %v525
      %597 = vmatpush.msra.mxu0 %v523
      %598 = vmatpush.msra.mxu0 %v521
      %599 = vmatpush.msra.mxu0 %v519
      %600 = vmatpush.msra.mxu0 %v517
      %601 = vmatpush.msra.mxu0 %v515
      %602 = vmatpush.msra.mxu0 %v513
      %603 = vmatpush.msra.mxu0 %v511
      %604 = vmatpush.msra.mxu0 %v509
      %605 = vmatpush.msra.mxu0 %v507
      %606 = vmatpush.msra.mxu0 %v505
      %607 = vmatpush.msra.mxu0 %v503
      %608 = vmatpush.msra.mxu0 %v501
      %609 = vmatpush.msra.mxu0 %v499
      %610 = vmatpush.msra.mxu0 %v497
      %611 = vmatmul.f32.gmra.mxu0 %v399
      %v612 = vpop.f32.mrf.mxu0
      %v613 = vadd.f32 %v593, %v612
      %614 = vdwg.mxu0
      %615 = vmatpush.msra.mxu0 %v432
      %616 = vmatpush.msra.mxu0 %v430
      %617 = vmatpush.msra.mxu0 %v428
      %618 = vmatpush.msra.mxu0 %v426
      %619 = vmatpush.msra.mxu0 %v424
      %620 = vmatpush.msra.mxu0 %v422
      %621 = vmatpush.msra.mxu0 %v420
      %622 = vmatpush.msra.mxu0 %v418
      %623 = vmatpush.msra.mxu0 %v416
      %624 = vmatpush.msra.mxu0 %v414
      %625 = vmatpush.msra.mxu0 %v412
      %626 = vmatpush.msra.mxu0 %v410
      %627 = vmatpush.msra.mxu0 %v408
      %628 = vmatpush.msra.mxu0 %v406
      %629 = vmatpush.msra.mxu0 %v404
      %630 = vmatpush.msra.mxu0 %v402
      %631 = vmatmul.f32.gmra.mxu0 %v339
      %v632 = vpop.f32.mrf.mxu0
      %v633 = vadd.f32 %v532, %v632
      %634 = vdwg.mxu0
      %635 = vmatpush.msra.mxu0 %v464
      %636 = vmatpush.msra.mxu0 %v462
      %637 = vmatpush.msra.mxu0 %v460
      %638 = vmatpush.msra.mxu0 %v458
      %639 = vmatpush.msra.mxu0 %v456
      %640 = vmatpush.msra.mxu0 %v454
      %641 = vmatpush.msra.mxu0 %v452
      %642 = vmatpush.msra.mxu0 %v450
      %643 = vmatpush.msra.mxu0 %v448
      %644 = vmatpush.msra.mxu0 %v446
      %645 = vmatpush.msra.mxu0 %v444
      %646 = vmatpush.msra.mxu0 %v442
      %647 = vmatpush.msra.mxu0 %v440
      %648 = vmatpush.msra.mxu0 %v438
      %649 = vmatpush.msra.mxu0 %v436
      %650 = vmatpush.msra.mxu0 %v434
      %651 = vmatmul.f32.gmra.mxu0 %v359
      %v652 = vpop.f32.mrf.mxu0
      %v653 = vadd.f32 %v633, %v652
      %654 = vdwg.mxu0
      %655 = vmatpush.msra.mxu0 %v496
      %656 = vmatpush.msra.mxu0 %v494
      %657 = vmatpush.msra.mxu0 %v492
      %658 = vmatpush.msra.mxu0 %v490
      %659 = vmatpush.msra.mxu0 %v488
      %660 = vmatpush.msra.mxu0 %v486
      %661 = vmatpush.msra.mxu0 %v484
      %662 = vmatpush.msra.mxu0 %v482
      %663 = vmatpush.msra.mxu0 %v480
      %664 = vmatpush.msra.mxu0 %v478
      %665 = vmatpush.msra.mxu0 %v476
      %666 = vmatpush.msra.mxu0 %v474
      %667 = vmatpush.msra.mxu0 %v472
      %668 = vmatpush.msra.mxu0 %v470
      %669 = vmatpush.msra.mxu0 %v468
      %670 = vmatpush.msra.mxu0 %v466
      %671 = vmatmul.f32.gmra.mxu0 %v379
      %v672 = vpop.f32.mrf.mxu0
      %v673 = vadd.f32 %v653, %v672
      %674 = vdwg.mxu0
      %675 = vmatpush.msra.mxu0 %v528
      %676 = vmatpush.msra.mxu0 %v526
      %677 = vmatpush.msra.mxu0 %v524
      %678 = vmatpush.msra.mxu0 %v522
      %679 = vmatpush.msra.mxu0 %v520
      %680 = vmatpush.msra.mxu0 %v518
      %681 = vmatpush.msra.mxu0 %v516
      %682 = vmatpush.msra.mxu0 %v514
      %683 = vmatpush.msra.mxu0 %v512
      %684 = vmatpush.msra.mxu0 %v510
      %685 = vmatpush.msra.mxu0 %v508
      %686 = vmatpush.msra.mxu0 %v506
      %687 = vmatpush.msra.mxu0 %v504
      %688 = vmatpush.msra.mxu0 %v502
      %689 = vmatpush.msra.mxu0 %v500
      %690 = vmatpush.msra.mxu0 %v498
      %691 = vmatmul.f32.gmra.mxu0 %v399
      %v692 = vpop.f32.mrf.mxu0
      %v693 = vadd.f32 %v673, %v692
      %694 = vdwg.mxu0
      %v697 = vrot.slane %v693, 6
      %vm698 = vcmask 1041408
      %v699 = vsel %vm698, %v613, %v697
      %701 = vst [vmem:[#allocation17] sm:$0xf] %v699
    $region77: #{tpu_custom_call.1} parent=1 // pred_fallthru
      _
    %v702 = vld [vmem:[#allocation2] sm:$0xff]
    %v703 = vld [vmem:[#allocation2 + $0x8] sm:$0x3f]
    %v704 = vld [vmem:[#allocation8] sm:$0xff]
    %v705 = vld [vmem:[#allocation8 + $0x8] sm:$0xff]
    %v706 = vld [vmem:[#allocation8 + $0x10] sm:$0x7f]
    %vm707 = vcmask 187392
    %v709 = vsel %vm707, %v702, 0
    %v712 = vsel %vm707, %v703, 0
    %vm714 = vcmask 1046528
    %v716 = vsel %vm714, %v706, 0
    %718 = vmatpush.msra.mxu0 0.0
    %719 = vmatpush.msra.mxu0 0.0
    %720 = vmatpush.msra.mxu0 0.0
    %721 = vmatpush.msra.mxu0 0.0
    %722 = vmatpush.msra.mxu0 0.0
    %723 = vmatpush.msra.mxu0 0.0
    %724 = vmatpush.msra.mxu0 0.0
    %725 = vmatpush.msra.mxu0 0.0
    %726 = vmatpush.msra.mxu0 0.0
    %727 = vmatpush.msra.mxu0 0.0
    %728 = vmatpush.msra.mxu0 0.0
    %729 = vmatpush.msra.mxu0 0.0
    %730 = vmatpush.msra.mxu0 0.0
    %731 = vmatpush.msra.mxu0 %v716
    %732 = vmatpush.msra.mxu0 %v705
    %733 = vmatpush.msra.mxu0 %v704
    %734 = vmatmul.f32.gmra.mxu0 %v709
    %v735 = vpop.f32.mrf.mxu0
    %v736 = vadd.f32 0.0, %v735
    %737 = vmatmul.f32.gmra.mxu0 %v712
    %v738 = vpop.f32.mrf.mxu0
    %v739 = vadd.f32 0.0, %v738
    %740 = vdwg.mxu0
    %v741 = vld [vmem:[#allocation5] sm:$0xff]
    %v742 = vld [vmem:[#allocation5 + $0x8] sm:$0xff]
    %v743 = vld [vmem:[#allocation5 + $0x10] sm:$0x3f]
    %v744 = vld [vmem:[#allocation5 + $0x18] sm:$0x3f]
    %v745 = vand.u32 2147483647, %v741
    %vm746 = vcmp.le.f32.partialorder %v745, 0.7853982
    %vm747 = vcmp.lt.s32.totalorder %v741, 0
    %v748 = vand.u32 %v741, 2139095040
    %v749 = vshrl.u32 %v748, 23
    %v750 = vsub.s32 %v749, 127
    %v751 = vand.u32 2147483647, %v741
    %v752 = vand.u32 %v751, 8388607
    %v753 = vor.u32 %v752, 8388608
    %v754 = vsub.s32 0, %v753
    %v755 = vadd.s32 %v750, 1
    %vm756 = vcmp.gt.s32.totalorder %v755, 0
    %v757 = vsel %vm756, %v755, 0
    %v758 = vshrl.u32 %v757, 5
    %v759 = vand.u32 %v757, 31
    %v760 = vsub.s32 32, %v759
    %v761 = vshrl.u32 683565275, %v760
    %v762 = vshll.u32 683565275, %v759
    %v763 = vshrl.u32 2475754826, %v760
    %v764 = vor.u32 %v762, %v763
    %v765 = vshll.u32 2475754826, %v759
    %v766 = vshrl.u32 2131351028, %v760
    %v767 = vor.u32 %v765, %v766
    %v768 = vshll.u32 2131351028, %v759
    %v769 = vshrl.u32 2102212464, %v760
    %v770 = vor.u32 %v768, %v769
    %v771 = vshll.u32 2102212464, %v759
    %v772 = vshrl.u32 920167782, %v760
    %v773 = vor.u32 %v771, %v772
    %v774 = vshll.u32 920167782, %v759
    %v775 = vshrl.u32 1326507024, %v760
    %v776 = vor.u32 %v774, %v775
    %vm777 = vcmp.lt.s32.totalorder %v758, 1
    %vm778 = vcmp.lt.s32.totalorder %v758, 2
    %vm779 = vcmp.lt.s32.totalorder %v758, 3
    %vm780 = vcmp.lt.s32.totalorder %v758, 4
    %v781 = vsel %vm777, %v761, %v764
    %v782 = vsel %vm780, %v770, 2102212464
    %v783 = vsel %vm779, %v767, %v782
    %v784 = vsel %vm778, %v781, %v783
    %v785 = vsel %vm777, %v764, %v767
    %v786 = vsel %vm780, %v773, 920167782
    %v787 = vsel %vm779, %v770, %v786
    %v788 = vsel %vm778, %v785, %v787
    %v789 = vsel %vm777, %v767, %v770
    %v790 = vsel %vm780, %v776, 1326507024
    %v791 = vsel %vm779, %v773, %v790
    %v792 = vsel %vm778, %v789, %v791
    %v793 = vshll.u32 %v753, 8
    %v794 = vand.u32 %v793, 65535
    %v795 = vshrl.u32 %v793, 16
    %v796 = vand.u32 %v792, 65535
    %v797 = vshrl.u32 %v792, 16
    %v798 = vmul.u32 %v794, %v796
    %v799 = vmul.u32 %v794, %v797
    %v800 = vmul.u32 %v795, %v796
    %v801 = vmul.u32 %v795, %v797
    %v802 = vshll.u32 %v799, 16
    %v803 = vshrl.u32 %v799, 16
    %v804 = vshll.u32 %v800, 16
    %v805 = vshrl.u32 %v800, 16
    %vm806 = vc.u32 %v798, %v802
    %v807 = vsel %vm806, 1, 0
    %v808 = vadd.s32 %v798, %v802
    %v809 = vadd.s32 %v801, %v807
    %vm810 = vc.u32 %v808, %v804
    %v811 = vsel %vm810, 1, 0
    %v812 = vadd.s32 %v808, %v804
    %v813 = vadd.s32 %v809, %v811
    %v814 = vadd.s32 %v813, %v803
    %v815 = vadd.s32 %v814, %v805
    %v816 = vand.u32 %v793, 65535
    %v817 = vshrl.u32 %v793, 16
    %v818 = vand.u32 %v788, 65535
    %v819 = vshrl.u32 %v788, 16
    %v820 = vmul.u32 %v816, %v818
    %v821 = vmul.u32 %v816, %v819
    %v822 = vmul.u32 %v817, %v818
    %v823 = vmul.u32 %v817, %v819
    %v824 = vshll.u32 %v821, 16
    %v825 = vshrl.u32 %v821, 16
    %v826 = vshll.u32 %v822, 16
    %v827 = vshrl.u32 %v822, 16
    %vm828 = vc.u32 %v820, %v824
    %v829 = vsel %vm828, 1, 0
    %v830 = vadd.s32 %v820, %v824
    %v831 = vadd.s32 %v823, %v829
    %vm832 = vc.u32 %v830, %v826
    %v833 = vsel %vm832, 1, 0
    %v834 = vadd.s32 %v830, %v826
    %v835 = vadd.s32 %v831, %v833
    %v836 = vadd.s32 %v835, %v825
    %v837 = vadd.s32 %v836, %v827
    %v838 = vmul.u32 %v793, %v784
    %v839 = vadd.s32 %v815, %v834
    %vm840 = vc.u32 %v815, %v834
    %v841 = vadd.s32 %v837, 1
    %v842 = vsel %vm840, %v841, %v837
    %v843 = vadd.s32 %v838, %v842
    %v844 = vadd.s32 %v843, 536870912
    %v845 = vshrl.u32 %v844, 30
    %v846 = vshll.u32 %v845, 30
    %v847 = vsub.s32 %v843, %v846
    %vm848 = vcmp.lt.s32.totalorder %v847, 0
    %v849 = vsub.s32 0, %v847
    %v850 = vsel %vm848, %v849, %v847
    %v851 = vclz %v850
    %v852 = vsub.s32 %v851, 2
    %vm853 = vcmp.gt.s32.totalorder 0, %v852
    %v854 = vsel %vm853, 0, %v852
    %v855 = vsub.s32 32, %v854
    %v856 = vshll.u32 %v847, %v854
    %v857 = vshrl.u32 %v839, %v855
    %v858 = vor.u32 %v856, %v857
    %v859 = vsub.s32 4294967266, %v854
    %v860 = vadd.s32 %v859, 127
    %v861 = vshll.u32 %v860, 23
    %v862 = vor.u32 4788187, %v861
    %v863 = vand.u32 2147483647, %v862
    %v865 = vcvt.s32.f32 %v858
    %v866 = vmul.f32 %v865, %v863
    %v867 = vxor.u32 %v866, 2147483648
    %v868 = vsel %vm747, %v867, %v866
    %v869 = vsub.s32 4, %v845
    %v870 = vsel %vm747, %v869, %v845
    %v871 = vsel %vm746, %v741, %v868
    %v872 = vsel %vm746, 0, %v870
    %v873 = vmul.f32 %v871, %v871
    %v874 = vmul.f32 %v873, -0.001358992
    %v875 = vadd.f32 %v874, 0.041655596
    %v876 = vmul.f32 %v873, %v875
    %v877 = vadd.f32 %v876, -0.4999988
    %v878 = vmul.f32 %v873, %v877
    %v879 = vadd.f32 1.0, %v878
    %v880 = vmul.f32 %v871, %v871
    %v881 = vmul.f32 %v880, -0.00019511016
    %v882 = vadd.f32 %v881, 0.008332121
    %v883 = vmul.f32 %v880, %v882
    %v884 = vadd.f32 %v883, -0.16666654
    %v885 = vmul.f32 %v880, %v884
    %v886 = vadd.f32 %v885, 1.0
    %v887 = vmul.f32 %v886, %v871
    %vm888 = vweird.f32 %v741
    %v889 = vadd.s32 %v872, 3
    %v890 = vand.u32 %v889, 3
    %vm891 = vcmp.lt.s32.totalorder %v890, 2
    %vm892 = vcmp.eq.s32.totalorder %v890, 0
    %v893 = vxor.u32 %v887, 2147483648
    %v894 = vsel %vm892, %v879, %v893
    %vm895 = vcmp.eq.s32.totalorder %v890, 2
    %v896 = vxor.u32 %v879, 2147483648
    %v897 = vsel %vm895, %v896, %v887
    %v898 = vsel %vm891, %v894, %v897
    %v899 = vsel %vm888, nan, %v898
    %v900 = vand.u32 2147483647, %v742
    %vm901 = vcmp.le.f32.partialorder %v900, 0.7853982
    %vm902 = vcmp.lt.s32.totalorder %v742, 0
    %v903 = vand.u32 %v742, 2139095040
    %v904 = vshrl.u32 %v903, 23
    %v905 = vsub.s32 %v904, 127
    %v906 = vand.u32 2147483647, %v742
    %v907 = vand.u32 %v906, 8388607
    %v908 = vor.u32 %v907, 8388608
    %v909 = vsub.s32 0, %v908
    %v910 = vadd.s32 %v905, 1
    %vm911 = vcmp.gt.s32.totalorder %v910, 0
    %v912 = vsel %vm911, %v910, 0
    %v913 = vshrl.u32 %v912, 5
    %v914 = vand.u32 %v912, 31
    %v915 = vsub.s32 32, %v914
    %v916 = vshrl.u32 683565275, %v915
    %v917 = vshll.u32 683565275, %v914
    %v918 = vshrl.u32 2475754826, %v915
    %v919 = vor.u32 %v917, %v918
    %v920 = vshll.u32 2475754826, %v914
    %v921 = vshrl.u32 2131351028, %v915
    %v922 = vor.u32 %v920, %v921
    %v923 = vshll.u32 2131351028, %v914
    %v924 = vshrl.u32 2102212464, %v915
    %v925 = vor.u32 %v923, %v924
    %v926 = vshll.u32 2102212464, %v914
    %v927 = vshrl.u32 920167782, %v915
    %v928 = vor.u32 %v926, %v927
    %v929 = vshll.u32 920167782, %v914
    %v930 = vshrl.u32 1326507024, %v915
    %v931 = vor.u32 %v929, %v930
    %vm932 = vcmp.lt.s32.totalorder %v913, 1
    %vm933 = vcmp.lt.s32.totalorder %v913, 2
    %vm934 = vcmp.lt.s32.totalorder %v913, 3
    %vm935 = vcmp.lt.s32.totalorder %v913, 4
    %v936 = vsel %vm932, %v916, %v919
    %v937 = vsel %vm935, %v925, 2102212464
    %v938 = vsel %vm934, %v922, %v937
    %v939 = vsel %vm933, %v936, %v938
    %v940 = vsel %vm932, %v919, %v922
    %v941 = vsel %vm935, %v928, 920167782
    %v942 = vsel %vm934, %v925, %v941
    %v943 = vsel %vm933, %v940, %v942
    %v944 = vsel %vm932, %v922, %v925
    %v945 = vsel %vm935, %v931, 1326507024
    %v946 = vsel %vm934, %v928, %v945
    %v947 = vsel %vm933, %v944, %v946
    %v948 = vshll.u32 %v908, 8
    %v949 = vand.u32 %v948, 65535
    %v950 = vshrl.u32 %v948, 16
    %v951 = vand.u32 %v947, 65535
    %v952 = vshrl.u32 %v947, 16
    %v953 = vmul.u32 %v949, %v951
    %v954 = vmul.u32 %v949, %v952
    %v955 = vmul.u32 %v950, %v951
    %v956 = vmul.u32 %v950, %v952
    %v957 = vshll.u32 %v954, 16
    %v958 = vshrl.u32 %v954, 16
    %v959 = vshll.u32 %v955, 16
    %v960 = vshrl.u32 %v955, 16
    %vm961 = vc.u32 %v953, %v957
    %v962 = vsel %vm961, 1, 0
    %v963 = vadd.s32 %v953, %v957
    %v964 = vadd.s32 %v956, %v962
    %vm965 = vc.u32 %v963, %v959
    %v966 = vsel %vm965, 1, 0
    %v967 = vadd.s32 %v963, %v959
    %v968 = vadd.s32 %v964, %v966
    %v969 = vadd.s32 %v968, %v958
    %v970 = vadd.s32 %v969, %v960
    %v971 = vand.u32 %v948, 65535
    %v972 = vshrl.u32 %v948, 16
    %v973 = vand.u32 %v943, 65535
    %v974 = vshrl.u32 %v943, 16
    %v975 = vmul.u32 %v971, %v973
    %v976 = vmul.u32 %v971, %v974
    %v977 = vmul.u32 %v972, %v973
    %v978 = vmul.u32 %v972, %v974
    %v979 = vshll.u32 %v976, 16
    %v980 = vshrl.u32 %v976, 16
    %v981 = vshll.u32 %v977, 16
    %v982 = vshrl.u32 %v977, 16
    %vm983 = vc.u32 %v975, %v979
    %v984 = vsel %vm983, 1, 0
    %v985 = vadd.s32 %v975, %v979
    %v986 = vadd.s32 %v978, %v984
    %vm987 = vc.u32 %v985, %v981
    %v988 = vsel %vm987, 1, 0
    %v989 = vadd.s32 %v985, %v981
    %v990 = vadd.s32 %v986, %v988
    %v991 = vadd.s32 %v990, %v980
    %v992 = vadd.s32 %v991, %v982
    %v993 = vmul.u32 %v948, %v939
    %v994 = vadd.s32 %v970, %v989
    %vm995 = vc.u32 %v970, %v989
    %v996 = vadd.s32 %v992, 1
    %v997 = vsel %vm995, %v996, %v992
    %v998 = vadd.s32 %v993, %v997
    %v999 = vadd.s32 %v998, 536870912
    %v1000 = vshrl.u32 %v999, 30
    %v1001 = vshll.u32 %v1000, 30
    %v1002 = vsub.s32 %v998, %v1001
    %vm1003 = vcmp.lt.s32.totalorder %v1002, 0
    %v1004 = vsub.s32 0, %v1002
    %v1005 = vsel %vm1003, %v1004, %v1002
    %v1006 = vclz %v1005
    %v1007 = vsub.s32 %v1006, 2
    %vm1008 = vcmp.gt.s32.totalorder 0, %v1007
    %v1009 = vsel %vm1008, 0, %v1007
    %v1010 = vsub.s32 32, %v1009
    %v1011 = vshll.u32 %v1002, %v1009
    %v1012 = vshrl.u32 %v994, %v1010
    %v1013 = vor.u32 %v1011, %v1012
    %v1014 = vsub.s32 4294967266, %v1009
    %v1015 = vadd.s32 %v1014, 127
    %v1016 = vshll.u32 %v1015, 23
    %v1017 = vor.u32 4788187, %v1016
    %v1018 = vand.u32 2147483647, %v1017
    %v1020 = vcvt.s32.f32 %v1013
    %v1021 = vmul.f32 %v1020, %v1018
    %v1022 = vxor.u32 %v1021, 2147483648
    %v1023 = vsel %vm902, %v1022, %v1021
    %v1024 = vsub.s32 4, %v1000
    %v1025 = vsel %vm902, %v1024, %v1000
    %v1026 = vsel %vm901, %v742, %v1023
    %v1027 = vsel %vm901, 0, %v1025
    %v1028 = vmul.f32 %v1026, %v1026
    %v1029 = vmul.f32 %v1028, -0.001358992
    %v1030 = vadd.f32 %v1029, 0.041655596
    %v1031 = vmul.f32 %v1028, %v1030
    %v1032 = vadd.f32 %v1031, -0.4999988
    %v1033 = vmul.f32 %v1028, %v1032
    %v1034 = vadd.f32 1.0, %v1033
    %v1035 = vmul.f32 %v1026, %v1026
    %v1036 = vmul.f32 %v1035, -0.00019511016
    %v1037 = vadd.f32 %v1036, 0.008332121
    %v1038 = vmul.f32 %v1035, %v1037
    %v1039 = vadd.f32 %v1038, -0.16666654
    %v1040 = vmul.f32 %v1035, %v1039
    %v1041 = vadd.f32 %v1040, 1.0
    %v1042 = vmul.f32 %v1041, %v1026
    %vm1043 = vweird.f32 %v742
    %v1044 = vadd.s32 %v1027, 3
    %v1045 = vand.u32 %v1044, 3
    %vm1046 = vcmp.lt.s32.totalorder %v1045, 2
    %vm1047 = vcmp.eq.s32.totalorder %v1045, 0
    %v1048 = vxor.u32 %v1042, 2147483648
    %v1049 = vsel %vm1047, %v1034, %v1048
    %vm1050 = vcmp.eq.s32.totalorder %v1045, 2
    %v1051 = vxor.u32 %v1034, 2147483648
    %v1052 = vsel %vm1050, %v1051, %v1042
    %v1053 = vsel %vm1046, %v1049, %v1052
    %v1054 = vsel %vm1043, nan, %v1053
    %v1055 = vand.u32 2147483647, %v743
    %vm1056 = vcmp.le.f32.partialorder %v1055, 0.7853982
    %vm1057 = vcmp.lt.s32.totalorder %v743, 0
    %v1058 = vand.u32 %v743, 2139095040
    %v1059 = vshrl.u32 %v1058, 23
    %v1060 = vsub.s32 %v1059, 127
    %v1061 = vand.u32 2147483647, %v743
    %v1062 = vand.u32 %v1061, 8388607
    %v1063 = vor.u32 %v1062, 8388608
    %v1064 = vsub.s32 0, %v1063
    %v1065 = vadd.s32 %v1060, 1
    %vm1066 = vcmp.gt.s32.totalorder %v1065, 0
    %v1067 = vsel %vm1066, %v1065, 0
    %v1068 = vshrl.u32 %v1067, 5
    %v1069 = vand.u32 %v1067, 31
    %v1070 = vsub.s32 32, %v1069
    %v1071 = vshrl.u32 683565275, %v1070
    %v1072 = vshll.u32 683565275, %v1069
    %v1073 = vshrl.u32 2475754826, %v1070
    %v1074 = vor.u32 %v1072, %v1073
    %v1075 = vshll.u32 2475754826, %v1069
    %v1076 = vshrl.u32 2131351028, %v1070
    %v1077 = vor.u32 %v1075, %v1076
    %v1078 = vshll.u32 2131351028, %v1069
    %v1079 = vshrl.u32 2102212464, %v1070
    %v1080 = vor.u32 %v1078, %v1079
    %v1081 = vshll.u32 2102212464, %v1069
    %v1082 = vshrl.u32 920167782, %v1070
    %v1083 = vor.u32 %v1081, %v1082
    %v1084 = vshll.u32 920167782, %v1069
    %v1085 = vshrl.u32 1326507024, %v1070
    %v1086 = vor.u32 %v1084, %v1085
    %vm1087 = vcmp.lt.s32.totalorder %v1068, 1
    %vm1088 = vcmp.lt.s32.totalorder %v1068, 2
    %vm1089 = vcmp.lt.s32.totalorder %v1068, 3
    %vm1090 = vcmp.lt.s32.totalorder %v1068, 4
    %v1091 = vsel %vm1087, %v1071, %v1074
    %v1092 = vsel %vm1090, %v1080, 2102212464
    %v1093 = vsel %vm1089, %v1077, %v1092
    %v1094 = vsel %vm1088, %v1091, %v1093
    %v1095 = vsel %vm1087, %v1074, %v1077
    %v1096 = vsel %vm1090, %v1083, 920167782
    %v1097 = vsel %vm1089, %v1080, %v1096
    %v1098 = vsel %vm1088, %v1095, %v1097
    %v1099 = vsel %vm1087, %v1077, %v1080
    %v1100 = vsel %vm1090, %v1086, 1326507024
    %v1101 = vsel %vm1089, %v1083, %v1100
    %v1102 = vsel %vm1088, %v1099, %v1101
    %v1103 = vshll.u32 %v1063, 8
    %v1104 = vand.u32 %v1103, 65535
    %v1105 = vshrl.u32 %v1103, 16
    %v1106 = vand.u32 %v1102, 65535
    %v1107 = vshrl.u32 %v1102, 16
    %v1108 = vmul.u32 %v1104, %v1106
    %v1109 = vmul.u32 %v1104, %v1107
    %v1110 = vmul.u32 %v1105, %v1106
    %v1111 = vmul.u32 %v1105, %v1107
    %v1112 = vshll.u32 %v1109, 16
    %v1113 = vshrl.u32 %v1109, 16
    %v1114 = vshll.u32 %v1110, 16
    %v1115 = vshrl.u32 %v1110, 16
    %vm1116 = vc.u32 %v1108, %v1112
    %v1117 = vsel %vm1116, 1, 0
    %v1118 = vadd.s32 %v1108, %v1112
    %v1119 = vadd.s32 %v1111, %v1117
    %vm1120 = vc.u32 %v1118, %v1114
    %v1121 = vsel %vm1120, 1, 0
    %v1122 = vadd.s32 %v1118, %v1114
    %v1123 = vadd.s32 %v1119, %v1121
    %v1124 = vadd.s32 %v1123, %v1113
    %v1125 = vadd.s32 %v1124, %v1115
    %v1126 = vand.u32 %v1103, 65535
    %v1127 = vshrl.u32 %v1103, 16
    %v1128 = vand.u32 %v1098, 65535
    %v1129 = vshrl.u32 %v1098, 16
    %v1130 = vmul.u32 %v1126, %v1128
    %v1131 = vmul.u32 %v1126, %v1129
    %v1132 = vmul.u32 %v1127, %v1128
    %v1133 = vmul.u32 %v1127, %v1129
    %v1134 = vshll.u32 %v1131, 16
    %v1135 = vshrl.u32 %v1131, 16
    %v1136 = vshll.u32 %v1132, 16
    %v1137 = vshrl.u32 %v1132, 16
    %vm1138 = vc.u32 %v1130, %v1134
    %v1139 = vsel %vm1138, 1, 0
    %v1140 = vadd.s32 %v1130, %v1134
    %v1141 = vadd.s32 %v1133, %v1139
    %vm1142 = vc.u32 %v1140, %v1136
    %v1143 = vsel %vm1142, 1, 0
    %v1144 = vadd.s32 %v1140, %v1136
    %v1145 = vadd.s32 %v1141, %v1143
    %v1146 = vadd.s32 %v1145, %v1135
    %v1147 = vadd.s32 %v1146, %v1137
    %v1148 = vmul.u32 %v1103, %v1094
    %v1149 = vadd.s32 %v1125, %v1144
    %vm1150 = vc.u32 %v1125, %v1144
    %v1151 = vadd.s32 %v1147, 1
    %v1152 = vsel %vm1150, %v1151, %v1147
    %v1153 = vadd.s32 %v1148, %v1152
    %v1154 = vadd.s32 %v1153, 536870912
    %v1155 = vshrl.u32 %v1154, 30
    %v1156 = vshll.u32 %v1155, 30
    %v1157 = vsub.s32 %v1153, %v1156
    %vm1158 = vcmp.lt.s32.totalorder %v1157, 0
    %v1159 = vsub.s32 0, %v1157
    %v1160 = vsel %vm1158, %v1159, %v1157
    %v1161 = vclz %v1160
    %v1162 = vsub.s32 %v1161, 2
    %vm1163 = vcmp.gt.s32.totalorder 0, %v1162
    %v1164 = vsel %vm1163, 0, %v1162
    %v1165 = vsub.s32 32, %v1164
    %v1166 = vshll.u32 %v1157, %v1164
    %v1167 = vshrl.u32 %v1149, %v1165
    %v1168 = vor.u32 %v1166, %v1167
    %v1169 = vsub.s32 4294967266, %v1164
    %v1170 = vadd.s32 %v1169, 127
    %v1171 = vshll.u32 %v1170, 23
    %v1172 = vor.u32 4788187, %v1171
    %v1173 = vand.u32 2147483647, %v1172
    %v1175 = vcvt.s32.f32 %v1168
    %v1176 = vmul.f32 %v1175, %v1173
    %v1177 = vxor.u32 %v1176, 2147483648
    %v1178 = vsel %vm1057, %v1177, %v1176
    %v1179 = vsub.s32 4, %v1155
    %v1180 = vsel %vm1057, %v1179, %v1155
    %v1181 = vsel %vm1056, %v743, %v1178
    %v1182 = vsel %vm1056, 0, %v1180
    %v1183 = vmul.f32 %v1181, %v1181
    %v1184 = vmul.f32 %v1183, -0.001358992
    %v1185 = vadd.f32 %v1184, 0.041655596
    %v1186 = vmul.f32 %v1183, %v1185
    %v1187 = vadd.f32 %v1186, -0.4999988
    %v1188 = vmul.f32 %v1183, %v1187
    %v1189 = vadd.f32 1.0, %v1188
    %v1190 = vmul.f32 %v1181, %v1181
    %v1191 = vmul.f32 %v1190, -0.00019511016
    %v1192 = vadd.f32 %v1191, 0.008332121
    %v1193 = vmul.f32 %v1190, %v1192
    %v1194 = vadd.f32 %v1193, -0.16666654
    %v1195 = vmul.f32 %v1190, %v1194
    %v1196 = vadd.f32 %v1195, 1.0
    %v1197 = vmul.f32 %v1196, %v1181
    %vm1198 = vweird.f32 %v743
    %v1199 = vadd.s32 %v1182, 3
    %v1200 = vand.u32 %v1199, 3
    %vm1201 = vcmp.lt.s32.totalorder %v1200, 2
    %vm1202 = vcmp.eq.s32.totalorder %v1200, 0
    %v1203 = vxor.u32 %v1197, 2147483648
    %v1204 = vsel %vm1202, %v1189, %v1203
    %vm1205 = vcmp.eq.s32.totalorder %v1200, 2
    %v1206 = vxor.u32 %v1189, 2147483648
    %v1207 = vsel %vm1205, %v1206, %v1197
    %v1208 = vsel %vm1201, %v1204, %v1207
    %v1209 = vsel %vm1198, nan, %v1208
    %v1210 = vand.u32 2147483647, %v744
    %vm1211 = vcmp.le.f32.partialorder %v1210, 0.7853982
    %vm1212 = vcmp.lt.s32.totalorder %v744, 0
    %v1213 = vand.u32 %v744, 2139095040
    %v1214 = vshrl.u32 %v1213, 23
    %v1215 = vsub.s32 %v1214, 127
    %v1216 = vand.u32 2147483647, %v744
    %v1217 = vand.u32 %v1216, 8388607
    %v1218 = vor.u32 %v1217, 8388608
    %v1219 = vsub.s32 0, %v1218
    %v1220 = vadd.s32 %v1215, 1
    %vm1221 = vcmp.gt.s32.totalorder %v1220, 0
    %v1222 = vsel %vm1221, %v1220, 0
    %v1223 = vshrl.u32 %v1222, 5
    %v1224 = vand.u32 %v1222, 31
    %v1225 = vsub.s32 32, %v1224
    %v1226 = vshrl.u32 683565275, %v1225
    %v1227 = vshll.u32 683565275, %v1224
    %v1228 = vshrl.u32 2475754826, %v1225
    %v1229 = vor.u32 %v1227, %v1228
    %v1230 = vshll.u32 2475754826, %v1224
    %v1231 = vshrl.u32 2131351028, %v1225
    %v1232 = vor.u32 %v1230, %v1231
    %v1233 = vshll.u32 2131351028, %v1224
    %v1234 = vshrl.u32 2102212464, %v1225
    %v1235 = vor.u32 %v1233, %v1234
    %v1236 = vshll.u32 2102212464, %v1224
    %v1237 = vshrl.u32 920167782, %v1225
    %v1238 = vor.u32 %v1236, %v1237
    %v1239 = vshll.u32 920167782, %v1224
    %v1240 = vshrl.u32 1326507024, %v1225
    %v1241 = vor.u32 %v1239, %v1240
    %vm1242 = vcmp.lt.s32.totalorder %v1223, 1
    %vm1243 = vcmp.lt.s32.totalorder %v1223, 2
    %vm1244 = vcmp.lt.s32.totalorder %v1223, 3
    %vm1245 = vcmp.lt.s32.totalorder %v1223, 4
    %v1246 = vsel %vm1242, %v1226, %v1229
    %v1247 = vsel %vm1245, %v1235, 2102212464
    %v1248 = vsel %vm1244, %v1232, %v1247
    %v1249 = vsel %vm1243, %v1246, %v1248
    %v1250 = vsel %vm1242, %v1229, %v1232
    %v1251 = vsel %vm1245, %v1238, 920167782
    %v1252 = vsel %vm1244, %v1235, %v1251
    %v1253 = vsel %vm1243, %v1250, %v1252
    %v1254 = vsel %vm1242, %v1232, %v1235
    %v1255 = vsel %vm1245, %v1241, 1326507024
    %v1256 = vsel %vm1244, %v1238, %v1255
    %v1257 = vsel %vm1243, %v1254, %v1256
    %v1258 = vshll.u32 %v1218, 8
    %v1259 = vand.u32 %v1258, 65535
    %v1260 = vshrl.u32 %v1258, 16
    %v1261 = vand.u32 %v1257, 65535
    %v1262 = vshrl.u32 %v1257, 16
    %v1263 = vmul.u32 %v1259, %v1261
    %v1264 = vmul.u32 %v1259, %v1262
    %v1265 = vmul.u32 %v1260, %v1261
    %v1266 = vmul.u32 %v1260, %v1262
    %v1267 = vshll.u32 %v1264, 16
    %v1268 = vshrl.u32 %v1264, 16
    %v1269 = vshll.u32 %v1265, 16
    %v1270 = vshrl.u32 %v1265, 16
    %vm1271 = vc.u32 %v1263, %v1267
    %v1272 = vsel %vm1271, 1, 0
    %v1273 = vadd.s32 %v1263, %v1267
    %v1274 = vadd.s32 %v1266, %v1272
    %vm1275 = vc.u32 %v1273, %v1269
    %v1276 = vsel %vm1275, 1, 0
    %v1277 = vadd.s32 %v1273, %v1269
    %v1278 = vadd.s32 %v1274, %v1276
    %v1279 = vadd.s32 %v1278, %v1268
    %v1280 = vadd.s32 %v1279, %v1270
    %v1281 = vand.u32 %v1258, 65535
    %v1282 = vshrl.u32 %v1258, 16
    %v1283 = vand.u32 %v1253, 65535
    %v1284 = vshrl.u32 %v1253, 16
    %v1285 = vmul.u32 %v1281, %v1283
    %v1286 = vmul.u32 %v1281, %v1284
    %v1287 = vmul.u32 %v1282, %v1283
    %v1288 = vmul.u32 %v1282, %v1284
    %v1289 = vshll.u32 %v1286, 16
    %v1290 = vshrl.u32 %v1286, 16
    %v1291 = vshll.u32 %v1287, 16
    %v1292 = vshrl.u32 %v1287, 16
    %vm1293 = vc.u32 %v1285, %v1289
    %v1294 = vsel %vm1293, 1, 0
    %v1295 = vadd.s32 %v1285, %v1289
    %v1296 = vadd.s32 %v1288, %v1294
    %vm1297 = vc.u32 %v1295, %v1291
    %v1298 = vsel %vm1297, 1, 0
    %v1299 = vadd.s32 %v1295, %v1291
    %v1300 = vadd.s32 %v1296, %v1298
    %v1301 = vadd.s32 %v1300, %v1290
    %v1302 = vadd.s32 %v1301, %v1292
    %v1303 = vmul.u32 %v1258, %v1249
    %v1304 = vadd.s32 %v1280, %v1299
    %vm1305 = vc.u32 %v1280, %v1299
    %v1306 = vadd.s32 %v1302, 1
    %v1307 = vsel %vm1305, %v1306, %v1302
    %v1308 = vadd.s32 %v1303, %v1307
    %v1309 = vadd.s32 %v1308, 536870912
    %v1310 = vshrl.u32 %v1309, 30
    %v1311 = vshll.u32 %v1310, 30
    %v1312 = vsub.s32 %v1308, %v1311
    %vm1313 = vcmp.lt.s32.totalorder %v1312, 0
    %v1314 = vsub.s32 0, %v1312
    %v1315 = vsel %vm1313, %v1314, %v1312
    %v1316 = vclz %v1315
    %v1317 = vsub.s32 %v1316, 2
    %vm1318 = vcmp.gt.s32.totalorder 0, %v1317
    %v1319 = vsel %vm1318, 0, %v1317
    %v1320 = vsub.s32 32, %v1319
    %v1321 = vshll.u32 %v1312, %v1319
    %v1322 = vshrl.u32 %v1304, %v1320
    %v1323 = vor.u32 %v1321, %v1322
    %v1324 = vsub.s32 4294967266, %v1319
    %v1325 = vadd.s32 %v1324, 127
    %v1326 = vshll.u32 %v1325, 23
    %v1327 = vor.u32 4788187, %v1326
    %v1328 = vand.u32 2147483647, %v1327
    %v1330 = vcvt.s32.f32 %v1323
    %v1331 = vmul.f32 %v1330, %v1328
    %v1332 = vxor.u32 %v1331, 2147483648
    %v1333 = vsel %vm1212, %v1332, %v1331
    %v1334 = vsub.s32 4, %v1310
    %v1335 = vsel %vm1212, %v1334, %v1310
    %v1336 = vsel %vm1211, %v744, %v1333
    %v1337 = vsel %vm1211, 0, %v1335
    %v1338 = vmul.f32 %v1336, %v1336
    %v1339 = vmul.f32 %v1338, -0.001358992
    %v1340 = vadd.f32 %v1339, 0.041655596
    %v1341 = vmul.f32 %v1338, %v1340
    %v1342 = vadd.f32 %v1341, -0.4999988
    %v1343 = vmul.f32 %v1338, %v1342
    %v1344 = vadd.f32 1.0, %v1343
    %v1345 = vmul.f32 %v1336, %v1336
    %v1346 = vmul.f32 %v1345, -0.00019511016
    %v1347 = vadd.f32 %v1346, 0.008332121
    %v1348 = vmul.f32 %v1345, %v1347
    %v1349 = vadd.f32 %v1348, -0.16666654
    %v1350 = vmul.f32 %v1345, %v1349
    %v1351 = vadd.f32 %v1350, 1.0
    %v1352 = vmul.f32 %v1351, %v1336
    %vm1353 = vweird.f32 %v744
    %v1354 = vadd.s32 %v1337, 3
    %v1355 = vand.u32 %v1354, 3
    %vm1356 = vcmp.lt.s32.totalorder %v1355, 2
    %vm1357 = vcmp.eq.s32.totalorder %v1355, 0
    %v1358 = vxor.u32 %v1352, 2147483648
    %v1359 = vsel %vm1357, %v1344, %v1358
    %vm1360 = vcmp.eq.s32.totalorder %v1355, 2
    %v1361 = vxor.u32 %v1344, 2147483648
    %v1362 = vsel %vm1360, %v1361, %v1352
    %v1363 = vsel %vm1356, %v1359, %v1362
    %v1364 = vsel %vm1353, nan, %v1363
    %v1365 = vand.u32 2147483647, %v741
    %vm1366 = vcmp.le.f32.partialorder %v1365, 0.7853982
    %vm1367 = vcmp.lt.s32.totalorder %v741, 0
    %v1368 = vand.u32 %v741, 2139095040
    %v1369 = vshrl.u32 %v1368, 23
    %v1370 = vsub.s32 %v1369, 127
    %v1371 = vand.u32 2147483647, %v741
    %v1372 = vand.u32 %v1371, 8388607
    %v1373 = vor.u32 %v1372, 8388608
    %v1374 = vsub.s32 0, %v1373
    %v1375 = vadd.s32 %v1370, 1
    %vm1376 = vcmp.gt.s32.totalorder %v1375, 0
    %v1377 = vsel %vm1376, %v1375, 0
    %v1378 = vshrl.u32 %v1377, 5
    %v1379 = vand.u32 %v1377, 31
    %v1380 = vsub.s32 32, %v1379
    %v1381 = vshrl.u32 683565275, %v1380
    %v1382 = vshll.u32 683565275, %v1379
    %v1383 = vshrl.u32 2475754826, %v1380
    %v1384 = vor.u32 %v1382, %v1383
    %v1385 = vshll.u32 2475754826, %v1379
    %v1386 = vshrl.u32 2131351028, %v1380
    %v1387 = vor.u32 %v1385, %v1386
    %v1388 = vshll.u32 2131351028, %v1379
    %v1389 = vshrl.u32 2102212464, %v1380
    %v1390 = vor.u32 %v1388, %v1389
    %v1391 = vshll.u32 2102212464, %v1379
    %v1392 = vshrl.u32 920167782, %v1380
    %v1393 = vor.u32 %v1391, %v1392
    %v1394 = vshll.u32 920167782, %v1379
    %v1395 = vshrl.u32 1326507024, %v1380
    %v1396 = vor.u32 %v1394, %v1395
    %vm1397 = vcmp.lt.s32.totalorder %v1378, 1
    %vm1398 = vcmp.lt.s32.totalorder %v1378, 2
    %vm1399 = vcmp.lt.s32.totalorder %v1378, 3
    %vm1400 = vcmp.lt.s32.totalorder %v1378, 4
    %v1401 = vsel %vm1397, %v1381, %v1384
    %v1402 = vsel %vm1400, %v1390, 2102212464
    %v1403 = vsel %vm1399, %v1387, %v1402
    %v1404 = vsel %vm1398, %v1401, %v1403
    %v1405 = vsel %vm1397, %v1384, %v1387
    %v1406 = vsel %vm1400, %v1393, 920167782
    %v1407 = vsel %vm1399, %v1390, %v1406
    %v1408 = vsel %vm1398, %v1405, %v1407
    %v1409 = vsel %vm1397, %v1387, %v1390
    %v1410 = vsel %vm1400, %v1396, 1326507024
    %v1411 = vsel %vm1399, %v1393, %v1410
    %v1412 = vsel %vm1398, %v1409, %v1411
    %v1413 = vshll.u32 %v1373, 8
    %v1414 = vand.u32 %v1413, 65535
    %v1415 = vshrl.u32 %v1413, 16
    %v1416 = vand.u32 %v1412, 65535
    %v1417 = vshrl.u32 %v1412, 16
    %v1418 = vmul.u32 %v1414, %v1416
    %v1419 = vmul.u32 %v1414, %v1417
    %v1420 = vmul.u32 %v1415, %v1416
    %v1421 = vmul.u32 %v1415, %v1417
    %v1422 = vshll.u32 %v1419, 16
    %v1423 = vshrl.u32 %v1419, 16
    %v1424 = vshll.u32 %v1420, 16
    %v1425 = vshrl.u32 %v1420, 16
    %vm1426 = vc.u32 %v1418, %v1422
    %v1427 = vsel %vm1426, 1, 0
    %v1428 = vadd.s32 %v1418, %v1422
    %v1429 = vadd.s32 %v1421, %v1427
    %vm1430 = vc.u32 %v1428, %v1424
    %v1431 = vsel %vm1430, 1, 0
    %v1432 = vadd.s32 %v1428, %v1424
    %v1433 = vadd.s32 %v1429, %v1431
    %v1434 = vadd.s32 %v1433, %v1423
    %v1435 = vadd.s32 %v1434, %v1425
    %v1436 = vand.u32 %v1413, 65535
    %v1437 = vshrl.u32 %v1413, 16
    %v1438 = vand.u32 %v1408, 65535
    %v1439 = vshrl.u32 %v1408, 16
    %v1440 = vmul.u32 %v1436, %v1438
    %v1441 = vmul.u32 %v1436, %v1439
    %v1442 = vmul.u32 %v1437, %v1438
    %v1443 = vmul.u32 %v1437, %v1439
    %v1444 = vshll.u32 %v1441, 16
    %v1445 = vshrl.u32 %v1441, 16
    %v1446 = vshll.u32 %v1442, 16
    %v1447 = vshrl.u32 %v1442, 16
    %vm1448 = vc.u32 %v1440, %v1444
    %v1449 = vsel %vm1448, 1, 0
    %v1450 = vadd.s32 %v1440, %v1444
    %v1451 = vadd.s32 %v1443, %v1449
    %vm1452 = vc.u32 %v1450, %v1446
    %v1453 = vsel %vm1452, 1, 0
    %v1454 = vadd.s32 %v1450, %v1446
    %v1455 = vadd.s32 %v1451, %v1453
    %v1456 = vadd.s32 %v1455, %v1445
    %v1457 = vadd.s32 %v1456, %v1447
    %v1458 = vmul.u32 %v1413, %v1404
    %v1459 = vadd.s32 %v1435, %v1454
    %vm1460 = vc.u32 %v1435, %v1454
    %v1461 = vadd.s32 %v1457, 1
    %v1462 = vsel %vm1460, %v1461, %v1457
    %v1463 = vadd.s32 %v1458, %v1462
    %v1464 = vadd.s32 %v1463, 536870912
    %v1465 = vshrl.u32 %v1464, 30
    %v1466 = vshll.u32 %v1465, 30
    %v1467 = vsub.s32 %v1463, %v1466
    %vm1468 = vcmp.lt.s32.totalorder %v1467, 0
    %v1469 = vsub.s32 0, %v1467
    %v1470 = vsel %vm1468, %v1469, %v1467
    %v1471 = vclz %v1470
    %v1472 = vsub.s32 %v1471, 2
    %vm1473 = vcmp.gt.s32.totalorder 0, %v1472
    %v1474 = vsel %vm1473, 0, %v1472
    %v1475 = vsub.s32 32, %v1474
    %v1476 = vshll.u32 %v1467, %v1474
    %v1477 = vshrl.u32 %v1459, %v1475
    %v1478 = vor.u32 %v1476, %v1477
    %v1479 = vsub.s32 4294967266, %v1474
    %v1480 = vadd.s32 %v1479, 127
    %v1481 = vshll.u32 %v1480, 23
    %v1482 = vor.u32 4788187, %v1481
    %v1483 = vand.u32 2147483647, %v1482
    %v1485 = vcvt.s32.f32 %v1478
    %v1486 = vmul.f32 %v1485, %v1483
    %v1487 = vxor.u32 %v1486, 2147483648
    %v1488 = vsel %vm1367, %v1487, %v1486
    %v1489 = vsub.s32 4, %v1465
    %v1490 = vsel %vm1367, %v1489, %v1465
    %v1491 = vsel %vm1366, %v741, %v1488
    %v1492 = vsel %vm1366, 0, %v1490
    %v1493 = vmul.f32 %v1491, %v1491
    %v1494 = vmul.f32 %v1493, -0.001358992
    %v1495 = vadd.f32 %v1494, 0.041655596
    %v1496 = vmul.f32 %v1493, %v1495
    %v1497 = vadd.f32 %v1496, -0.4999988
    %v1498 = vmul.f32 %v1493, %v1497
    %v1499 = vadd.f32 1.0, %v1498
    %v1500 = vmul.f32 %v1491, %v1491
    %v1501 = vmul.f32 %v1500, -0.00019511016
    %v1502 = vadd.f32 %v1501, 0.008332121
    %v1503 = vmul.f32 %v1500, %v1502
    %v1504 = vadd.f32 %v1503, -0.16666654
    %v1505 = vmul.f32 %v1500, %v1504
    %v1506 = vadd.f32 %v1505, 1.0
    %v1507 = vmul.f32 %v1506, %v1491
    %vm1508 = vweird.f32 %v741
    %v1509 = vand.u32 %v1492, 3
    %vm1510 = vcmp.lt.s32.totalorder %v1509, 2
    %vm1511 = vcmp.eq.s32.totalorder %v1509, 0
    %v1512 = vxor.u32 %v1507, 2147483648
    %v1513 = vsel %vm1511, %v1499, %v1512
    %vm1514 = vcmp.eq.s32.totalorder %v1509, 2
    %v1515 = vxor.u32 %v1499, 2147483648
    %v1516 = vsel %vm1514, %v1515, %v1507
    %v1517 = vsel %vm1510, %v1513, %v1516
    %v1518 = vsel %vm1508, nan, %v1517
    %v1519 = vand.u32 2147483647, %v742
    %vm1520 = vcmp.le.f32.partialorder %v1519, 0.7853982
    %vm1521 = vcmp.lt.s32.totalorder %v742, 0
    %v1522 = vand.u32 %v742, 2139095040
    %v1523 = vshrl.u32 %v1522, 23
    %v1524 = vsub.s32 %v1523, 127
    %v1525 = vand.u32 2147483647, %v742
    %v1526 = vand.u32 %v1525, 8388607
    %v1527 = vor.u32 %v1526, 8388608
    %v1528 = vsub.s32 0, %v1527
    %v1529 = vadd.s32 %v1524, 1
    %vm1530 = vcmp.gt.s32.totalorder %v1529, 0
    %v1531 = vsel %vm1530, %v1529, 0
    %v1532 = vshrl.u32 %v1531, 5
    %v1533 = vand.u32 %v1531, 31
    %v1534 = vsub.s32 32, %v1533
    %v1535 = vshrl.u32 683565275, %v1534
    %v1536 = vshll.u32 683565275, %v1533
    %v1537 = vshrl.u32 2475754826, %v1534
    %v1538 = vor.u32 %v1536, %v1537
    %v1539 = vshll.u32 2475754826, %v1533
    %v1540 = vshrl.u32 2131351028, %v1534
    %v1541 = vor.u32 %v1539, %v1540
    %v1542 = vshll.u32 2131351028, %v1533
    %v1543 = vshrl.u32 2102212464, %v1534
    %v1544 = vor.u32 %v1542, %v1543
    %v1545 = vshll.u32 2102212464, %v1533
    %v1546 = vshrl.u32 920167782, %v1534
    %v1547 = vor.u32 %v1545, %v1546
    %v1548 = vshll.u32 920167782, %v1533
    %v1549 = vshrl.u32 1326507024, %v1534
    %v1550 = vor.u32 %v1548, %v1549
    %vm1551 = vcmp.lt.s32.totalorder %v1532, 1
    %vm1552 = vcmp.lt.s32.totalorder %v1532, 2
    %vm1553 = vcmp.lt.s32.totalorder %v1532, 3
    %vm1554 = vcmp.lt.s32.totalorder %v1532, 4
    %v1555 = vsel %vm1551, %v1535, %v1538
    %v1556 = vsel %vm1554, %v1544, 2102212464
    %v1557 = vsel %vm1553, %v1541, %v1556
    %v1558 = vsel %vm1552, %v1555, %v1557
    %v1559 = vsel %vm1551, %v1538, %v1541
    %v1560 = vsel %vm1554, %v1547, 920167782
    %v1561 = vsel %vm1553, %v1544, %v1560
    %v1562 = vsel %vm1552, %v1559, %v1561
    %v1563 = vsel %vm1551, %v1541, %v1544
    %v1564 = vsel %vm1554, %v1550, 1326507024
    %v1565 = vsel %vm1553, %v1547, %v1564
    %v1566 = vsel %vm1552, %v1563, %v1565
    %v1567 = vshll.u32 %v1527, 8
    %v1568 = vand.u32 %v1567, 65535
    %v1569 = vshrl.u32 %v1567, 16
    %v1570 = vand.u32 %v1566, 65535
    %v1571 = vshrl.u32 %v1566, 16
    %v1572 = vmul.u32 %v1568, %v1570
    %v1573 = vmul.u32 %v1568, %v1571
    %v1574 = vmul.u32 %v1569, %v1570
    %v1575 = vmul.u32 %v1569, %v1571
    %v1576 = vshll.u32 %v1573, 16
    %v1577 = vshrl.u32 %v1573, 16
    %v1578 = vshll.u32 %v1574, 16
    %v1579 = vshrl.u32 %v1574, 16
    %vm1580 = vc.u32 %v1572, %v1576
    %v1581 = vsel %vm1580, 1, 0
    %v1582 = vadd.s32 %v1572, %v1576
    %v1583 = vadd.s32 %v1575, %v1581
    %vm1584 = vc.u32 %v1582, %v1578
    %v1585 = vsel %vm1584, 1, 0
    %v1586 = vadd.s32 %v1582, %v1578
    %v1587 = vadd.s32 %v1583, %v1585
    %v1588 = vadd.s32 %v1587, %v1577
    %v1589 = vadd.s32 %v1588, %v1579
    %v1590 = vand.u32 %v1567, 65535
    %v1591 = vshrl.u32 %v1567, 16
    %v1592 = vand.u32 %v1562, 65535
    %v1593 = vshrl.u32 %v1562, 16
    %v1594 = vmul.u32 %v1590, %v1592
    %v1595 = vmul.u32 %v1590, %v1593
    %v1596 = vmul.u32 %v1591, %v1592
    %v1597 = vmul.u32 %v1591, %v1593
    %v1598 = vshll.u32 %v1595, 16
    %v1599 = vshrl.u32 %v1595, 16
    %v1600 = vshll.u32 %v1596, 16
    %v1601 = vshrl.u32 %v1596, 16
    %vm1602 = vc.u32 %v1594, %v1598
    %v1603 = vsel %vm1602, 1, 0
    %v1604 = vadd.s32 %v1594, %v1598
    %v1605 = vadd.s32 %v1597, %v1603
    %vm1606 = vc.u32 %v1604, %v1600
    %v1607 = vsel %vm1606, 1, 0
    %v1608 = vadd.s32 %v1604, %v1600
    %v1609 = vadd.s32 %v1605, %v1607
    %v1610 = vadd.s32 %v1609, %v1599
    %v1611 = vadd.s32 %v1610, %v1601
    %v1612 = vmul.u32 %v1567, %v1558
    %v1613 = vadd.s32 %v1589, %v1608
    %vm1614 = vc.u32 %v1589, %v1608
    %v1615 = vadd.s32 %v1611, 1
    %v1616 = vsel %vm1614, %v1615, %v1611
    %v1617 = vadd.s32 %v1612, %v1616
    %v1618 = vadd.s32 %v1617, 536870912
    %v1619 = vshrl.u32 %v1618, 30
    %v1620 = vshll.u32 %v1619, 30
    %v1621 = vsub.s32 %v1617, %v1620
    %vm1622 = vcmp.lt.s32.totalorder %v1621, 0
    %v1623 = vsub.s32 0, %v1621
    %v1624 = vsel %vm1622, %v1623, %v1621
    %v1625 = vclz %v1624
    %v1626 = vsub.s32 %v1625, 2
    %vm1627 = vcmp.gt.s32.totalorder 0, %v1626
    %v1628 = vsel %vm1627, 0, %v1626
    %v1629 = vsub.s32 32, %v1628
    %v1630 = vshll.u32 %v1621, %v1628
    %v1631 = vshrl.u32 %v1613, %v1629
    %v1632 = vor.u32 %v1630, %v1631
    %v1633 = vsub.s32 4294967266, %v1628
    %v1634 = vadd.s32 %v1633, 127
    %v1635 = vshll.u32 %v1634, 23
    %v1636 = vor.u32 4788187, %v1635
    %v1637 = vand.u32 2147483647, %v1636
    %v1639 = vcvt.s32.f32 %v1632
    %v1640 = vmul.f32 %v1639, %v1637
    %v1641 = vxor.u32 %v1640, 2147483648
    %v1642 = vsel %vm1521, %v1641, %v1640
    %v1643 = vsub.s32 4, %v1619
    %v1644 = vsel %vm1521, %v1643, %v1619
    %v1645 = vsel %vm1520, %v742, %v1642
    %v1646 = vsel %vm1520, 0, %v1644
    %v1647 = vmul.f32 %v1645, %v1645
    %v1648 = vmul.f32 %v1647, -0.001358992
    %v1649 = vadd.f32 %v1648, 0.041655596
    %v1650 = vmul.f32 %v1647, %v1649
    %v1651 = vadd.f32 %v1650, -0.4999988
    %v1652 = vmul.f32 %v1647, %v1651
    %v1653 = vadd.f32 1.0, %v1652
    %v1654 = vmul.f32 %v1645, %v1645
    %v1655 = vmul.f32 %v1654, -0.00019511016
    %v1656 = vadd.f32 %v1655, 0.008332121
    %v1657 = vmul.f32 %v1654, %v1656
    %v1658 = vadd.f32 %v1657, -0.16666654
    %v1659 = vmul.f32 %v1654, %v1658
    %v1660 = vadd.f32 %v1659, 1.0
    %v1661 = vmul.f32 %v1660, %v1645
    %vm1662 = vweird.f32 %v742
    %v1663 = vand.u32 %v1646, 3
    %vm1664 = vcmp.lt.s32.totalorder %v1663, 2
    %vm1665 = vcmp.eq.s32.totalorder %v1663, 0
    %v1666 = vxor.u32 %v1661, 2147483648
    %v1667 = vsel %vm1665, %v1653, %v1666
    %vm1668 = vcmp.eq.s32.totalorder %v1663, 2
    %v1669 = vxor.u32 %v1653, 2147483648
    %v1670 = vsel %vm1668, %v1669, %v1661
    %v1671 = vsel %vm1664, %v1667, %v1670
    %v1672 = vsel %vm1662, nan, %v1671
    %v1673 = vand.u32 2147483647, %v743
    %vm1674 = vcmp.le.f32.partialorder %v1673, 0.7853982
    %vm1675 = vcmp.lt.s32.totalorder %v743, 0
    %v1676 = vand.u32 %v743, 2139095040
    %v1677 = vshrl.u32 %v1676, 23
    %v1678 = vsub.s32 %v1677, 127
    %v1679 = vand.u32 2147483647, %v743
    %v1680 = vand.u32 %v1679, 8388607
    %v1681 = vor.u32 %v1680, 8388608
    %v1682 = vsub.s32 0, %v1681
    %v1683 = vadd.s32 %v1678, 1
    %vm1684 = vcmp.gt.s32.totalorder %v1683, 0
    %v1685 = vsel %vm1684, %v1683, 0
    %v1686 = vshrl.u32 %v1685, 5
    %v1687 = vand.u32 %v1685, 31
    %v1688 = vsub.s32 32, %v1687
    %v1689 = vshrl.u32 683565275, %v1688
    %v1690 = vshll.u32 683565275, %v1687
    %v1691 = vshrl.u32 2475754826, %v1688
    %v1692 = vor.u32 %v1690, %v1691
    %v1693 = vshll.u32 2475754826, %v1687
    %v1694 = vshrl.u32 2131351028, %v1688
    %v1695 = vor.u32 %v1693, %v1694
    %v1696 = vshll.u32 2131351028, %v1687
    %v1697 = vshrl.u32 2102212464, %v1688
    %v1698 = vor.u32 %v1696, %v1697
    %v1699 = vshll.u32 2102212464, %v1687
    %v1700 = vshrl.u32 920167782, %v1688
    %v1701 = vor.u32 %v1699, %v1700
    %v1702 = vshll.u32 920167782, %v1687
    %v1703 = vshrl.u32 1326507024, %v1688
    %v1704 = vor.u32 %v1702, %v1703
    %vm1705 = vcmp.lt.s32.totalorder %v1686, 1
    %vm1706 = vcmp.lt.s32.totalorder %v1686, 2
    %vm1707 = vcmp.lt.s32.totalorder %v1686, 3
    %vm1708 = vcmp.lt.s32.totalorder %v1686, 4
    %v1709 = vsel %vm1705, %v1689, %v1692
    %v1710 = vsel %vm1708, %v1698, 2102212464
    %v1711 = vsel %vm1707, %v1695, %v1710
    %v1712 = vsel %vm1706, %v1709, %v1711
    %v1713 = vsel %vm1705, %v1692, %v1695
    %v1714 = vsel %vm1708, %v1701, 920167782
    %v1715 = vsel %vm1707, %v1698, %v1714
    %v1716 = vsel %vm1706, %v1713, %v1715
    %v1717 = vsel %vm1705, %v1695, %v1698
    %v1718 = vsel %vm1708, %v1704, 1326507024
    %v1719 = vsel %vm1707, %v1701, %v1718
    %v1720 = vsel %vm1706, %v1717, %v1719
    %v1721 = vshll.u32 %v1681, 8
    %v1722 = vand.u32 %v1721, 65535
    %v1723 = vshrl.u32 %v1721, 16
    %v1724 = vand.u32 %v1720, 65535
    %v1725 = vshrl.u32 %v1720, 16
    %v1726 = vmul.u32 %v1722, %v1724
    %v1727 = vmul.u32 %v1722, %v1725
    %v1728 = vmul.u32 %v1723, %v1724
    %v1729 = vmul.u32 %v1723, %v1725
    %v1730 = vshll.u32 %v1727, 16
    %v1731 = vshrl.u32 %v1727, 16
    %v1732 = vshll.u32 %v1728, 16
    %v1733 = vshrl.u32 %v1728, 16
    %vm1734 = vc.u32 %v1726, %v1730
    %v1735 = vsel %vm1734, 1, 0
    %v1736 = vadd.s32 %v1726, %v1730
    %v1737 = vadd.s32 %v1729, %v1735
    %vm1738 = vc.u32 %v1736, %v1732
    %v1739 = vsel %vm1738, 1, 0
    %v1740 = vadd.s32 %v1736, %v1732
    %v1741 = vadd.s32 %v1737, %v1739
    %v1742 = vadd.s32 %v1741, %v1731
    %v1743 = vadd.s32 %v1742, %v1733
    %v1744 = vand.u32 %v1721, 65535
    %v1745 = vshrl.u32 %v1721, 16
    %v1746 = vand.u32 %v1716, 65535
    %v1747 = vshrl.u32 %v1716, 16
    %v1748 = vmul.u32 %v1744, %v1746
    %v1749 = vmul.u32 %v1744, %v1747
    %v1750 = vmul.u32 %v1745, %v1746
    %v1751 = vmul.u32 %v1745, %v1747
    %v1752 = vshll.u32 %v1749, 16
    %v1753 = vshrl.u32 %v1749, 16
    %v1754 = vshll.u32 %v1750, 16
    %v1755 = vshrl.u32 %v1750, 16
    %vm1756 = vc.u32 %v1748, %v1752
    %v1757 = vsel %vm1756, 1, 0
    %v1758 = vadd.s32 %v1748, %v1752
    %v1759 = vadd.s32 %v1751, %v1757
    %vm1760 = vc.u32 %v1758, %v1754
    %v1761 = vsel %vm1760, 1, 0
    %v1762 = vadd.s32 %v1758, %v1754
    %v1763 = vadd.s32 %v1759, %v1761
    %v1764 = vadd.s32 %v1763, %v1753
    %v1765 = vadd.s32 %v1764, %v1755
    %v1766 = vmul.u32 %v1721, %v1712
    %v1767 = vadd.s32 %v1743, %v1762
    %vm1768 = vc.u32 %v1743, %v1762
    %v1769 = vadd.s32 %v1765, 1
    %v1770 = vsel %vm1768, %v1769, %v1765
    %v1771 = vadd.s32 %v1766, %v1770
    %v1772 = vadd.s32 %v1771, 536870912
    %v1773 = vshrl.u32 %v1772, 30
    %v1774 = vshll.u32 %v1773, 30
    %v1775 = vsub.s32 %v1771, %v1774
    %vm1776 = vcmp.lt.s32.totalorder %v1775, 0
    %v1777 = vsub.s32 0, %v1775
    %v1778 = vsel %vm1776, %v1777, %v1775
    %v1779 = vclz %v1778
    %v1780 = vsub.s32 %v1779, 2
    %vm1781 = vcmp.gt.s32.totalorder 0, %v1780
    %v1782 = vsel %vm1781, 0, %v1780
    %v1783 = vsub.s32 32, %v1782
    %v1784 = vshll.u32 %v1775, %v1782
    %v1785 = vshrl.u32 %v1767, %v1783
    %v1786 = vor.u32 %v1784, %v1785
    %v1787 = vsub.s32 4294967266, %v1782
    %v1788 = vadd.s32 %v1787, 127
    %v1789 = vshll.u32 %v1788, 23
    %v1790 = vor.u32 4788187, %v1789
    %v1791 = vand.u32 2147483647, %v1790
    %v1793 = vcvt.s32.f32 %v1786
    %v1794 = vmul.f32 %v1793, %v1791
    %v1795 = vxor.u32 %v1794, 2147483648
    %v1796 = vsel %vm1675, %v1795, %v1794
    %v1797 = vsub.s32 4, %v1773
    %v1798 = vsel %vm1675, %v1797, %v1773
    %v1799 = vsel %vm1674, %v743, %v1796
    %v1800 = vsel %vm1674, 0, %v1798
    %v1801 = vmul.f32 %v1799, %v1799
    %v1802 = vmul.f32 %v1801, -0.001358992
    %v1803 = vadd.f32 %v1802, 0.041655596
    %v1804 = vmul.f32 %v1801, %v1803
    %v1805 = vadd.f32 %v1804, -0.4999988
    %v1806 = vmul.f32 %v1801, %v1805
    %v1807 = vadd.f32 1.0, %v1806
    %v1808 = vmul.f32 %v1799, %v1799
    %v1809 = vmul.f32 %v1808, -0.00019511016
    %v1810 = vadd.f32 %v1809, 0.008332121
    %v1811 = vmul.f32 %v1808, %v1810
    %v1812 = vadd.f32 %v1811, -0.16666654
    %v1813 = vmul.f32 %v1808, %v1812
    %v1814 = vadd.f32 %v1813, 1.0
    %v1815 = vmul.f32 %v1814, %v1799
    %vm1816 = vweird.f32 %v743
    %v1817 = vand.u32 %v1800, 3
    %vm1818 = vcmp.lt.s32.totalorder %v1817, 2
    %vm1819 = vcmp.eq.s32.totalorder %v1817, 0
    %v1820 = vxor.u32 %v1815, 2147483648
    %v1821 = vsel %vm1819, %v1807, %v1820
    %vm1822 = vcmp.eq.s32.totalorder %v1817, 2
    %v1823 = vxor.u32 %v1807, 2147483648
    %v1824 = vsel %vm1822, %v1823, %v1815
    %v1825 = vsel %vm1818, %v1821, %v1824
    %v1826 = vsel %vm1816, nan, %v1825
    %v1827 = vand.u32 2147483647, %v744
    %vm1828 = vcmp.le.f32.partialorder %v1827, 0.7853982
    %vm1829 = vcmp.lt.s32.totalorder %v744, 0
    %v1830 = vand.u32 %v744, 2139095040
    %v1831 = vshrl.u32 %v1830, 23
    %v1832 = vsub.s32 %v1831, 127
    %v1833 = vand.u32 2147483647, %v744
    %v1834 = vand.u32 %v1833, 8388607
    %v1835 = vor.u32 %v1834, 8388608
    %v1836 = vsub.s32 0, %v1835
    %v1837 = vadd.s32 %v1832, 1
    %vm1838 = vcmp.gt.s32.totalorder %v1837, 0
    %v1839 = vsel %vm1838, %v1837, 0
    %v1840 = vshrl.u32 %v1839, 5
    %v1841 = vand.u32 %v1839, 31
    %v1842 = vsub.s32 32, %v1841
    %v1843 = vshrl.u32 683565275, %v1842
    %v1844 = vshll.u32 683565275, %v1841
    %v1845 = vshrl.u32 2475754826, %v1842
    %v1846 = vor.u32 %v1844, %v1845
    %v1847 = vshll.u32 2475754826, %v1841
    %v1848 = vshrl.u32 2131351028, %v1842
    %v1849 = vor.u32 %v1847, %v1848
    %v1850 = vshll.u32 2131351028, %v1841
    %v1851 = vshrl.u32 2102212464, %v1842
    %v1852 = vor.u32 %v1850, %v1851
    %v1853 = vshll.u32 2102212464, %v1841
    %v1854 = vshrl.u32 920167782, %v1842
    %v1855 = vor.u32 %v1853, %v1854
    %v1856 = vshll.u32 920167782, %v1841
    %v1857 = vshrl.u32 1326507024, %v1842
    %v1858 = vor.u32 %v1856, %v1857
    %vm1859 = vcmp.lt.s32.totalorder %v1840, 1
    %vm1860 = vcmp.lt.s32.totalorder %v1840, 2
    %vm1861 = vcmp.lt.s32.totalorder %v1840, 3
    %vm1862 = vcmp.lt.s32.totalorder %v1840, 4
    %v1863 = vsel %vm1859, %v1843, %v1846
    %v1864 = vsel %vm1862, %v1852, 2102212464
    %v1865 = vsel %vm1861, %v1849, %v1864
    %v1866 = vsel %vm1860, %v1863, %v1865
    %v1867 = vsel %vm1859, %v1846, %v1849
    %v1868 = vsel %vm1862, %v1855, 920167782
    %v1869 = vsel %vm1861, %v1852, %v1868
    %v1870 = vsel %vm1860, %v1867, %v1869
    %v1871 = vsel %vm1859, %v1849, %v1852
    %v1872 = vsel %vm1862, %v1858, 1326507024
    %v1873 = vsel %vm1861, %v1855, %v1872
    %v1874 = vsel %vm1860, %v1871, %v1873
    %v1875 = vshll.u32 %v1835, 8
    %v1876 = vand.u32 %v1875, 65535
    %v1877 = vshrl.u32 %v1875, 16
    %v1878 = vand.u32 %v1874, 65535
    %v1879 = vshrl.u32 %v1874, 16
    %v1880 = vmul.u32 %v1876, %v1878
    %v1881 = vmul.u32 %v1876, %v1879
    %v1882 = vmul.u32 %v1877, %v1878
    %v1883 = vmul.u32 %v1877, %v1879
    %v1884 = vshll.u32 %v1881, 16
    %v1885 = vshrl.u32 %v1881, 16
    %v1886 = vshll.u32 %v1882, 16
    %v1887 = vshrl.u32 %v1882, 16
    %vm1888 = vc.u32 %v1880, %v1884
    %v1889 = vsel %vm1888, 1, 0
    %v1890 = vadd.s32 %v1880, %v1884
    %v1891 = vadd.s32 %v1883, %v1889
    %vm1892 = vc.u32 %v1890, %v1886
    %v1893 = vsel %vm1892, 1, 0
    %v1894 = vadd.s32 %v1890, %v1886
    %v1895 = vadd.s32 %v1891, %v1893
    %v1896 = vadd.s32 %v1895, %v1885
    %v1897 = vadd.s32 %v1896, %v1887
    %v1898 = vand.u32 %v1875, 65535
    %v1899 = vshrl.u32 %v1875, 16
    %v1900 = vand.u32 %v1870, 65535
    %v1901 = vshrl.u32 %v1870, 16
    %v1902 = vmul.u32 %v1898, %v1900
    %v1903 = vmul.u32 %v1898, %v1901
    %v1904 = vmul.u32 %v1899, %v1900
    %v1905 = vmul.u32 %v1899, %v1901
    %v1906 = vshll.u32 %v1903, 16
    %v1907 = vshrl.u32 %v1903, 16
    %v1908 = vshll.u32 %v1904, 16
    %v1909 = vshrl.u32 %v1904, 16
    %vm1910 = vc.u32 %v1902, %v1906
    %v1911 = vsel %vm1910, 1, 0
    %v1912 = vadd.s32 %v1902, %v1906
    %v1913 = vadd.s32 %v1905, %v1911
    %vm1914 = vc.u32 %v1912, %v1908
    %v1915 = vsel %vm1914, 1, 0
    %v1916 = vadd.s32 %v1912, %v1908
    %v1917 = vadd.s32 %v1913, %v1915
    %v1918 = vadd.s32 %v1917, %v1907
    %v1919 = vadd.s32 %v1918, %v1909
    %v1920 = vmul.u32 %v1875, %v1866
    %v1921 = vadd.s32 %v1897, %v1916
    %vm1922 = vc.u32 %v1897, %v1916
    %v1923 = vadd.s32 %v1919, 1
    %v1924 = vsel %vm1922, %v1923, %v1919
    %v1925 = vadd.s32 %v1920, %v1924
    %v1926 = vadd.s32 %v1925, 536870912
    %v1927 = vshrl.u32 %v1926, 30
    %v1928 = vshll.u32 %v1927, 30
    %v1929 = vsub.s32 %v1925, %v1928
    %vm1930 = vcmp.lt.s32.totalorder %v1929, 0
    %v1931 = vsub.s32 0, %v1929
    %v1932 = vsel %vm1930, %v1931, %v1929
    %v1933 = vclz %v1932
    %v1934 = vsub.s32 %v1933, 2
    %vm1935 = vcmp.gt.s32.totalorder 0, %v1934
    %v1936 = vsel %vm1935, 0, %v1934
    %v1937 = vsub.s32 32, %v1936
    %v1938 = vshll.u32 %v1929, %v1936
    %v1939 = vshrl.u32 %v1921, %v1937
    %v1940 = vor.u32 %v1938, %v1939
    %v1941 = vsub.s32 4294967266, %v1936
    %v1942 = vadd.s32 %v1941, 127
    %v1943 = vshll.u32 %v1942, 23
    %v1944 = vor.u32 4788187, %v1943
    %v1945 = vand.u32 2147483647, %v1944
    %v1947 = vcvt.s32.f32 %v1940
    %v1948 = vmul.f32 %v1947, %v1945
    %v1949 = vxor.u32 %v1948, 2147483648
    %v1950 = vsel %vm1829, %v1949, %v1948
    %v1951 = vsub.s32 4, %v1927
    %v1952 = vsel %vm1829, %v1951, %v1927
    %v1953 = vsel %vm1828, %v744, %v1950
    %v1954 = vsel %vm1828, 0, %v1952
    %v1955 = vmul.f32 %v1953, %v1953
    %v1956 = vmul.f32 %v1955, -0.001358992
    %v1957 = vadd.f32 %v1956, 0.041655596
    %v1958 = vmul.f32 %v1955, %v1957
    %v1959 = vadd.f32 %v1958, -0.4999988
    %v1960 = vmul.f32 %v1955, %v1959
    %v1961 = vadd.f32 1.0, %v1960
    %v1962 = vmul.f32 %v1953, %v1953
    %v1963 = vmul.f32 %v1962, -0.00019511016
    %v1964 = vadd.f32 %v1963, 0.008332121
    %v1965 = vmul.f32 %v1962, %v1964
    %v1966 = vadd.f32 %v1965, -0.16666654
    %v1967 = vmul.f32 %v1962, %v1966
    %v1968 = vadd.f32 %v1967, 1.0
    %v1969 = vmul.f32 %v1968, %v1953
    %vm1970 = vweird.f32 %v744
    %v1971 = vand.u32 %v1954, 3
    %vm1972 = vcmp.lt.s32.totalorder %v1971, 2
    %vm1973 = vcmp.eq.s32.totalorder %v1971, 0
    %v1974 = vxor.u32 %v1969, 2147483648
    %v1975 = vsel %vm1973, %v1961, %v1974
    %vm1976 = vcmp.eq.s32.totalorder %v1971, 2
    %v1977 = vxor.u32 %v1961, 2147483648
    %v1978 = vsel %vm1976, %v1977, %v1969
    %v1979 = vsel %vm1972, %v1975, %v1978
    %v1980 = vsel %vm1970, nan, %v1979
    %v1981 = vld [vmem:[#allocation14] sm:$0xff]
    %v1982 = vld [vmem:[#allocation14 + $0x8] sm:$0xff]
    %v1983 = vld [vmem:[#allocation14 + $0x10] sm:$0xff]
    %v1984 = vld [vmem:[#allocation14 + $0x18] sm:$0xff]
    %v1985 = vld [vmem:[#allocation14 + $0x20] sm:$0xff]
    %v1986 = vld [vmem:[#allocation14 + $0x28] sm:$0xff]
    %v1987 = vld [vmem:[#allocation14 + $0x30] sm:$0xff]
    %v1988 = vld [vmem:[#allocation14 + $0x38] sm:$0xff]
    %v1989 = vld [vmem:[#allocation14 + $0x40] sm:$0xff]
    %v1990 = vld [vmem:[#allocation14 + $0x48] sm:$0xff]
    %v1991 = vld [vmem:[#allocation14 + $0x50] sm:$0xff]
    %v1992 = vld [vmem:[#allocation14 + $0x58] sm:$0xff]
    %v1993 = vld [vmem:[#allocation14 + $0x60] sm:$0xff]
    %v1994 = vld [vmem:[#allocation14 + $0x68] sm:$0xff]
    %v1995 = vld [vmem:[#allocation14 + $0x70] sm:$0xff]
    %v1996 = vld [vmem:[#allocation14 + $0x78] sm:$0xff]
    %v1997 = vld [vmem:[#allocation14 + $0x80] sm:$0xff]
    %v1998 = vld [vmem:[#allocation14 + $0x88] sm:$0xff]
    %v1999 = vld [vmem:[#allocation14 + $0x90] sm:$0xff]
    %v2000 = vld [vmem:[#allocation14 + $0x98] sm:$0xff]
    %v2001 = vld [vmem:[#allocation14 + $0xa0] sm:$0xff]
    %v2002 = vld [vmem:[#allocation14 + $0xa8] sm:$0xff]
    %v2003 = vld [vmem:[#allocation14 + $0xb0] sm:$0xff]
    %v2004 = vld [vmem:[#allocation14 + $0xb8] sm:$0xff]
    %v2005 = vld [vmem:[#allocation14 + $0xc0] sm:$0xff]
    %v2006 = vld [vmem:[#allocation14 + $0xc8] sm:$0xff]
    %v2007 = vld [vmem:[#allocation14 + $0xd0] sm:$0xff]
    %v2008 = vld [vmem:[#allocation14 + $0xd8] sm:$0xff]
    %v2009 = vld [vmem:[#allocation14 + $0xe0] sm:$0xff]
    %v2010 = vld [vmem:[#allocation14 + $0xe8] sm:$0xff]
    %v2011 = vld [vmem:[#allocation14 + $0xf0] sm:$0xff]
    %v2012 = vld [vmem:[#allocation14 + $0xf8] sm:$0xff]
    %v2013 = vld [vmem:[#allocation14 + $0x100] sm:$0xff]
    %v2014 = vld [vmem:[#allocation14 + $0x108] sm:$0xff]
    %v2015 = vld [vmem:[#allocation14 + $0x110] sm:$0xff]
    %v2016 = vld [vmem:[#allocation14 + $0x118] sm:$0xff]
    %v2017 = vld [vmem:[#allocation14 + $0x120] sm:$0xff]
    %v2018 = vld [vmem:[#allocation14 + $0x128] sm:$0xff]
    %v2019 = vld [vmem:[#allocation14 + $0x130] sm:$0xff]
    %v2020 = vld [vmem:[#allocation14 + $0x138] sm:$0xff]
    %v2021 = vld [vmem:[#allocation14 + $0x140] sm:$0xff]
    %v2022 = vld [vmem:[#allocation14 + $0x148] sm:$0xff]
    %v2023 = vld [vmem:[#allocation14 + $0x150] sm:$0xff]
    %v2024 = vld [vmem:[#allocation14 + $0x158] sm:$0xff]
    %v2025 = vld [vmem:[#allocation14 + $0x160] sm:$0xff]
    %v2026 = vld [vmem:[#allocation14 + $0x168] sm:$0xff]
    %v2027 = vld [vmem:[#allocation14 + $0x170] sm:$0xff]
    %v2028 = vld [vmem:[#allocation14 + $0x178] sm:$0xff]
    %v2029 = vld [vmem:[#allocation14 + $0x180] sm:$0xff]
    %v2030 = vld [vmem:[#allocation14 + $0x188] sm:$0xff]
    %v2031 = vld [vmem:[#allocation14 + $0x190] sm:$0xff]
    %v2032 = vld [vmem:[#allocation14 + $0x198] sm:$0xff]
    %v2033 = vld [vmem:[#allocation14 + $0x1a0] sm:$0xff]
    %v2034 = vld [vmem:[#allocation14 + $0x1a8] sm:$0xff]
    %v2035 = vld [vmem:[#allocation14 + $0x1b0] sm:$0xff]
    %v2036 = vld [vmem:[#allocation14 + $0x1b8] sm:$0xff]
    %v2037 = vld [vmem:[#allocation14 + $0x1c0] sm:$0xff]
    %v2038 = vld [vmem:[#allocation14 + $0x1c8] sm:$0xff]
    %v2039 = vld [vmem:[#allocation14 + $0x1d0] sm:$0xff]
    %v2040 = vld [vmem:[#allocation14 + $0x1d8] sm:$0xff]
    %v2041 = vld [vmem:[#allocation14 + $0x1e0] sm:$0xff]
    %v2042 = vld [vmem:[#allocation14 + $0x1e8] sm:$0xff]
    %v2043 = vld [vmem:[#allocation14 + $0x1f0] sm:$0xff]
    %v2044 = vld [vmem:[#allocation14 + $0x1f8] sm:$0xff]
    %v2045 = vld [vmem:[#allocation14 + $0x200] sm:$0xff]
    %v2046 = vld [vmem:[#allocation14 + $0x208] sm:$0xff]
    %v2047 = vld [vmem:[#allocation14 + $0x210] sm:$0xff]
    %v2048 = vld [vmem:[#allocation14 + $0x218] sm:$0xff]
    %v2049 = vld [vmem:[#allocation14 + $0x220] sm:$0xff]
    %v2050 = vld [vmem:[#allocation14 + $0x228] sm:$0xff]
    %v2051 = vld [vmem:[#allocation14 + $0x230] sm:$0xff]
    %v2052 = vld [vmem:[#allocation14 + $0x238] sm:$0xff]
    %vm2053 = vcmask 785408
    %v2055 = vsel %vm2053, %v1054, 0
    %v2058 = vsel %vm2053, %v1364, 0
    %2060 = vmatpush.msra.mxu0 %v2027
    %2061 = vmatpush.msra.mxu0 %v2025
    %2062 = vmatpush.msra.mxu0 %v2023
    %2063 = vmatpush.msra.mxu0 %v2021
    %2064 = vmatpush.msra.mxu0 %v2019
    %2065 = vmatpush.msra.mxu0 %v2017
    %2066 = vmatpush.msra.mxu0 %v2015
    %2067 = vmatpush.msra.mxu0 %v2013
    %2068 = vmatpush.msra.mxu0 %v2011
    %2069 = vmatpush.msra.mxu0 %v2009
    %2070 = vmatpush.msra.mxu0 %v2007
    %2071 = vmatpush.msra.mxu0 %v2005
    %2072 = vmatpush.msra.mxu0 %v2003
    %2073 = vmatpush.msra.mxu0 %v2001
    %2074 = vmatpush.msra.mxu0 %v1999
    %2075 = vmatpush.msra.mxu0 %v1997
    %2076 = vmatmul.f32.gmra.mxu0 %v899
    %v2077 = vpop.f32.mrf.mxu0
    %v2078 = vadd.f32 0.0, %v2077
    %2079 = vmatmul.f32.gmra.mxu0 %v1209
    %v2080 = vpop.f32.mrf.mxu0
    %v2081 = vadd.f32 0.0, %v2080
    %2082 = vdwg.mxu0
    %2083 = vmatpush.msra.mxu0 0.0
    %2084 = vmatpush.msra.mxu0 0.0
    %2085 = vmatpush.msra.mxu0 0.0
    %2086 = vmatpush.msra.mxu0 0.0
    %2087 = vmatpush.msra.mxu0 %v2051
    %2088 = vmatpush.msra.mxu0 %v2049
    %2089 = vmatpush.msra.mxu0 %v2047
    %2090 = vmatpush.msra.mxu0 %v2045
    %2091 = vmatpush.msra.mxu0 %v2043
    %2092 = vmatpush.msra.mxu0 %v2041
    %2093 = vmatpush.msra.mxu0 %v2039
    %2094 = vmatpush.msra.mxu0 %v2037
    %2095 = vmatpush.msra.mxu0 %v2035
    %2096 = vmatpush.msra.mxu0 %v2033
    %2097 = vmatpush.msra.mxu0 %v2031
    %2098 = vmatpush.msra.mxu0 %v2029
    %2099 = vmatmul.f32.gmra.mxu0 %v2055
    %v2100 = vpop.f32.mrf.mxu0
    %v2101 = vadd.f32 %v2078, %v2100
    %2102 = vmatmul.f32.gmra.mxu0 %v2058
    %v2103 = vpop.f32.mrf.mxu0
    %v2104 = vadd.f32 %v2081, %v2103
    %2105 = vdwg.mxu0
    %2106 = vmatpush.msra.mxu0 %v2028
    %2107 = vmatpush.msra.mxu0 %v2026
    %2108 = vmatpush.msra.mxu0 %v2024
    %2109 = vmatpush.msra.mxu0 %v2022
    %2110 = vmatpush.msra.mxu0 %v2020
    %2111 = vmatpush.msra.mxu0 %v2018
    %2112 = vmatpush.msra.mxu0 %v2016
    %2113 = vmatpush.msra.mxu0 %v2014
    %2114 = vmatpush.msra.mxu0 %v2012
    %2115 = vmatpush.msra.mxu0 %v2010
    %2116 = vmatpush.msra.mxu0 %v2008
    %2117 = vmatpush.msra.mxu0 %v2006
    %2118 = vmatpush.msra.mxu0 %v2004
    %2119 = vmatpush.msra.mxu0 %v2002
    %2120 = vmatpush.msra.mxu0 %v2000
    %2121 = vmatpush.msra.mxu0 %v1998
    %2122 = vmatmul.f32.gmra.mxu0 %v899
    %v2123 = vpop.f32.mrf.mxu0
    %v2124 = vadd.f32 0.0, %v2123
    %2125 = vmatmul.f32.gmra.mxu0 %v1209
    %v2126 = vpop.f32.mrf.mxu0
    %v2127 = vadd.f32 0.0, %v2126
    %2128 = vdwg.mxu0
    %2129 = vmatpush.msra.mxu0 0.0
    %2130 = vmatpush.msra.mxu0 0.0
    %2131 = vmatpush.msra.mxu0 0.0
    %2132 = vmatpush.msra.mxu0 0.0
    %2133 = vmatpush.msra.mxu0 %v2052
    %2134 = vmatpush.msra.mxu0 %v2050
    %2135 = vmatpush.msra.mxu0 %v2048
    %2136 = vmatpush.msra.mxu0 %v2046
    %2137 = vmatpush.msra.mxu0 %v2044
    %2138 = vmatpush.msra.mxu0 %v2042
    %2139 = vmatpush.msra.mxu0 %v2040
    %2140 = vmatpush.msra.mxu0 %v2038
    %2141 = vmatpush.msra.mxu0 %v2036
    %2142 = vmatpush.msra.mxu0 %v2034
    %2143 = vmatpush.msra.mxu0 %v2032
    %2144 = vmatpush.msra.mxu0 %v2030
    %2145 = vmatmul.f32.gmra.mxu0 %v2055
    %v2146 = vpop.f32.mrf.mxu0
    %v2147 = vadd.f32 %v2124, %v2146
    %2148 = vmatmul.f32.gmra.mxu0 %v2058
    %v2149 = vpop.f32.mrf.mxu0
    %v2150 = vadd.f32 %v2127, %v2149
    %2151 = vdwg.mxu0
    %vm2152 = vcmask 523264
    %v2154 = vsel %vm2152, %v736, 0
    %v2157 = vsel %vm2152, %v739, 0
    %2159 = vmatpush.msra.mxu0 0.0
    %2160 = vmatpush.msra.mxu0 0.0
    %2161 = vmatpush.msra.mxu0 0.0
    %2162 = vmatpush.msra.mxu0 0.0
    %2163 = vmatpush.msra.mxu0 0.0
    %2164 = vmatpush.msra.mxu0 0.0
    %2165 = vmatpush.msra.mxu0 0.0
    %2166 = vmatpush.msra.mxu0 0.0
    %2167 = vmatpush.msra.mxu0 %v1995
    %2168 = vmatpush.msra.mxu0 %v1993
    %2169 = vmatpush.msra.mxu0 %v1991
    %2170 = vmatpush.msra.mxu0 %v1989
    %2171 = vmatpush.msra.mxu0 %v1987
    %2172 = vmatpush.msra.mxu0 %v1985
    %2173 = vmatpush.msra.mxu0 %v1983
    %2174 = vmatpush.msra.mxu0 %v1981
    %2175 = vmatmul.f32.gmra.mxu0 %v2154
    %v2176 = vpop.f32.mrf.mxu0
    %v2177 = vadd.f32 %v2101, %v2176
    %2178 = vmatmul.f32.gmra.mxu0 %v2157
    %v2179 = vpop.f32.mrf.mxu0
    %v2180 = vadd.f32 %v2104, %v2179
    %2181 = vdwg.mxu0
    %2182 = vmatpush.msra.mxu0 0.0
    %2183 = vmatpush.msra.mxu0 0.0
    %2184 = vmatpush.msra.mxu0 0.0
    %2185 = vmatpush.msra.mxu0 0.0
    %2186 = vmatpush.msra.mxu0 0.0
    %2187 = vmatpush.msra.mxu0 0.0
    %2188 = vmatpush.msra.mxu0 0.0
    %2189 = vmatpush.msra.mxu0 0.0
    %2190 = vmatpush.msra.mxu0 %v1996
    %2191 = vmatpush.msra.mxu0 %v1994
    %2192 = vmatpush.msra.mxu0 %v1992
    %2193 = vmatpush.msra.mxu0 %v1990
    %2194 = vmatpush.msra.mxu0 %v1988
    %2195 = vmatpush.msra.mxu0 %v1986
    %2196 = vmatpush.msra.mxu0 %v1984
    %2197 = vmatpush.msra.mxu0 %v1982
    %2198 = vmatmul.f32.gmra.mxu0 %v2154
    %v2199 = vpop.f32.mrf.mxu0
    %v2200 = vadd.f32 %v2147, %v2199
    %2201 = vmatmul.f32.gmra.mxu0 %v2157
    %v2202 = vpop.f32.mrf.mxu0
    %v2203 = vadd.f32 %v2150, %v2202
    %2204 = vdwg.mxu0
    %v2205 = vld [vmem:[#allocation14 + $0x240] sm:$0xff]
    %v2206 = vld [vmem:[#allocation14 + $0x248] sm:$0xff]
    %v2207 = vld [vmem:[#allocation14 + $0x250] sm:$0xff]
    %v2208 = vld [vmem:[#allocation14 + $0x258] sm:$0xff]
    %v2209 = vld [vmem:[#allocation14 + $0x260] sm:$0xff]
    %v2210 = vld [vmem:[#allocation14 + $0x268] sm:$0xff]
    %v2211 = vld [vmem:[#allocation14 + $0x270] sm:$0xff]
    %v2212 = vld [vmem:[#allocation14 + $0x278] sm:$0xff]
    %v2213 = vld [vmem:[#allocation14 + $0x280] sm:$0xff]
    %v2214 = vld [vmem:[#allocation14 + $0x288] sm:$0xff]
    %v2215 = vld [vmem:[#allocation14 + $0x290] sm:$0xff]
    %v2216 = vld [vmem:[#allocation14 + $0x298] sm:$0xff]
    %v2217 = vld [vmem:[#allocation14 + $0x2a0] sm:$0xff]
    %v2218 = vld [vmem:[#allocation14 + $0x2a8] sm:$0xff]
    %v2219 = vld [vmem:[#allocation14 + $0x2b0] sm:$0xff]
    %v2220 = vld [vmem:[#allocation14 + $0x2b8] sm:$0xff]
    %v2221 = vld [vmem:[#allocation14 + $0x2c0] sm:$0xff]
    %v2222 = vld [vmem:[#allocation14 + $0x2c8] sm:$0xff]
    %v2223 = vld [vmem:[#allocation14 + $0x2d0] sm:$0xff]
    %v2224 = vld [vmem:[#allocation14 + $0x2d8] sm:$0xff]
    %v2225 = vld [vmem:[#allocation14 + $0x2e0] sm:$0xff]
    %v2226 = vld [vmem:[#allocation14 + $0x2e8] sm:$0xff]
    %v2227 = vld [vmem:[#allocation14 + $0x2f0] sm:$0xff]
    %v2228 = vld [vmem:[#allocation14 + $0x2f8] sm:$0xff]
    %v2229 = vld [vmem:[#allocation14 + $0x300] sm:$0xff]
    %v2230 = vld [vmem:[#allocation14 + $0x308] sm:$0xff]
    %v2231 = vld [vmem:[#allocation14 + $0x310] sm:$0xff]
    %v2232 = vld [vmem:[#allocation14 + $0x318] sm:$0xff]
    %v2233 = vld [vmem:[#allocation14 + $0x320] sm:$0xff]
    %v2234 = vld [vmem:[#allocation14 + $0x328] sm:$0xff]
    %v2235 = vld [vmem:[#allocation14 + $0x330] sm:$0xff]
    %v2236 = vld [vmem:[#allocation14 + $0x338] sm:$0xff]
    %v2237 = vld [vmem:[#allocation14 + $0x340] sm:$0xff]
    %v2238 = vld [vmem:[#allocation14 + $0x348] sm:$0xff]
    %v2239 = vld [vmem:[#allocation14 + $0x350] sm:$0xff]
    %v2240 = vld [vmem:[#allocation14 + $0x358] sm:$0xff]
    %v2241 = vld [vmem:[#allocation14 + $0x360] sm:$0xff]
    %v2242 = vld [vmem:[#allocation14 + $0x368] sm:$0xff]
    %v2243 = vld [vmem:[#allocation14 + $0x370] sm:$0xff]
    %v2244 = vld [vmem:[#allocation14 + $0x378] sm:$0xff]
    %v2245 = vld [vmem:[#allocation14 + $0x380] sm:$0xff]
    %v2246 = vld [vmem:[#allocation14 + $0x388] sm:$0xff]
    %v2247 = vld [vmem:[#allocation14 + $0x390] sm:$0xff]
    %v2248 = vld [vmem:[#allocation14 + $0x398] sm:$0xff]
    %v2249 = vld [vmem:[#allocation14 + $0x3a0] sm:$0xff]
    %v2250 = vld [vmem:[#allocation14 + $0x3a8] sm:$0xff]
    %v2251 = vld [vmem:[#allocation14 + $0x3b0] sm:$0xff]
    %v2252 = vld [vmem:[#allocation14 + $0x3b8] sm:$0xff]
    %v2253 = vld [vmem:[#allocation14 + $0x3c0] sm:$0xff]
    %v2254 = vld [vmem:[#allocation14 + $0x3c8] sm:$0xff]
    %v2255 = vld [vmem:[#allocation14 + $0x3d0] sm:$0xff]
    %v2256 = vld [vmem:[#allocation14 + $0x3d8] sm:$0xff]
    %v2257 = vld [vmem:[#allocation14 + $0x3e0] sm:$0xff]
    %v2258 = vld [vmem:[#allocation14 + $0x3e8] sm:$0xff]
    %v2259 = vld [vmem:[#allocation14 + $0x3f0] sm:$0xff]
    %v2260 = vld [vmem:[#allocation14 + $0x3f8] sm:$0xff]
    %v2262 = vsel %vm2053, %v1672, 0
    %v2265 = vsel %vm2053, %v1980, 0
    %2267 = vmatpush.msra.mxu0 %v2235
    %2268 = vmatpush.msra.mxu0 %v2233
    %2269 = vmatpush.msra.mxu0 %v2231
    %2270 = vmatpush.msra.mxu0 %v2229
    %2271 = vmatpush.msra.mxu0 %v2227
    %2272 = vmatpush.msra.mxu0 %v2225
    %2273 = vmatpush.msra.mxu0 %v2223
    %2274 = vmatpush.msra.mxu0 %v2221
    %2275 = vmatpush.msra.mxu0 %v2219
    %2276 = vmatpush.msra.mxu0 %v2217
    %2277 = vmatpush.msra.mxu0 %v2215
    %2278 = vmatpush.msra.mxu0 %v2213
    %2279 = vmatpush.msra.mxu0 %v2211
    %2280 = vmatpush.msra.mxu0 %v2209
    %2281 = vmatpush.msra.mxu0 %v2207
    %2282 = vmatpush.msra.mxu0 %v2205
    %2283 = vmatmul.f32.gmra.mxu0 %v1518
    %v2284 = vpop.f32.mrf.mxu0
    %v2285 = vadd.f32 0.0, %v2284
    %2286 = vmatmul.f32.gmra.mxu0 %v1826
    %v2287 = vpop.f32.mrf.mxu0
    %v2288 = vadd.f32 0.0, %v2287
    %2289 = vdwg.mxu0
    %2290 = vmatpush.msra.mxu0 0.0
    %2291 = vmatpush.msra.mxu0 0.0
    %2292 = vmatpush.msra.mxu0 0.0
    %2293 = vmatpush.msra.mxu0 0.0
    %2294 = vmatpush.msra.mxu0 %v2259
    %2295 = vmatpush.msra.mxu0 %v2257
    %2296 = vmatpush.msra.mxu0 %v2255
    %2297 = vmatpush.msra.mxu0 %v2253
    %2298 = vmatpush.msra.mxu0 %v2251
    %2299 = vmatpush.msra.mxu0 %v2249
    %2300 = vmatpush.msra.mxu0 %v2247
    %2301 = vmatpush.msra.mxu0 %v2245
    %2302 = vmatpush.msra.mxu0 %v2243
    %2303 = vmatpush.msra.mxu0 %v2241
    %2304 = vmatpush.msra.mxu0 %v2239
    %2305 = vmatpush.msra.mxu0 %v2237
    %2306 = vmatmul.f32.gmra.mxu0 %v2262
    %v2307 = vpop.f32.mrf.mxu0
    %v2308 = vadd.f32 %v2285, %v2307
    %2309 = vmatmul.f32.gmra.mxu0 %v2265
    %v2310 = vpop.f32.mrf.mxu0
    %v2311 = vadd.f32 %v2288, %v2310
    %2312 = vdwg.mxu0
    %2313 = vmatpush.msra.mxu0 %v2236
    %2314 = vmatpush.msra.mxu0 %v2234
    %2315 = vmatpush.msra.mxu0 %v2232
    %2316 = vmatpush.msra.mxu0 %v2230
    %2317 = vmatpush.msra.mxu0 %v2228
    %2318 = vmatpush.msra.mxu0 %v2226
    %2319 = vmatpush.msra.mxu0 %v2224
    %2320 = vmatpush.msra.mxu0 %v2222
    %2321 = vmatpush.msra.mxu0 %v2220
    %2322 = vmatpush.msra.mxu0 %v2218
    %2323 = vmatpush.msra.mxu0 %v2216
    %2324 = vmatpush.msra.mxu0 %v2214
    %2325 = vmatpush.msra.mxu0 %v2212
    %2326 = vmatpush.msra.mxu0 %v2210
    %2327 = vmatpush.msra.mxu0 %v2208
    %2328 = vmatpush.msra.mxu0 %v2206
    %2329 = vmatmul.f32.gmra.mxu0 %v1518
    %v2330 = vpop.f32.mrf.mxu0
    %v2331 = vadd.f32 0.0, %v2330
    %2332 = vmatmul.f32.gmra.mxu0 %v1826
    %v2333 = vpop.f32.mrf.mxu0
    %v2334 = vadd.f32 0.0, %v2333
    %2335 = vdwg.mxu0
    %2336 = vmatpush.msra.mxu0 0.0
    %2337 = vmatpush.msra.mxu0 0.0
    %2338 = vmatpush.msra.mxu0 0.0
    %2339 = vmatpush.msra.mxu0 0.0
    %2340 = vmatpush.msra.mxu0 %v2260
    %2341 = vmatpush.msra.mxu0 %v2258
    %2342 = vmatpush.msra.mxu0 %v2256
    %2343 = vmatpush.msra.mxu0 %v2254
    %2344 = vmatpush.msra.mxu0 %v2252
    %2345 = vmatpush.msra.mxu0 %v2250
    %2346 = vmatpush.msra.mxu0 %v2248
    %2347 = vmatpush.msra.mxu0 %v2246
    %2348 = vmatpush.msra.mxu0 %v2244
    %2349 = vmatpush.msra.mxu0 %v2242
    %2350 = vmatpush.msra.mxu0 %v2240
    %2351 = vmatpush.msra.mxu0 %v2238
    %2352 = vmatmul.f32.gmra.mxu0 %v2262
    %v2353 = vpop.f32.mrf.mxu0
    %v2354 = vadd.f32 %v2331, %v2353
    %2355 = vmatmul.f32.gmra.mxu0 %v2265
    %v2356 = vpop.f32.mrf.mxu0
    %v2357 = vadd.f32 %v2334, %v2356
    %2358 = vdwg.mxu0
    %v2359 = vadd.f32 %v2177, %v2308
    %v2360 = vadd.f32 %v2200, %v2354
    %v2361 = vadd.f32 %v2180, %v2311
    %v2362 = vadd.f32 %v2203, %v2357
    %v2363 = vld [vmem:[%s9] sm:$0x3]
    %v2365 = vperm.slane %v2363, 0
    %v2366 = vperm.slane %v2363, 1
    %v2369 = vadd.f32 %v2359, %v2365
    %v2370 = vadd.f32 %v2360, %v2366
    %v2371 = vadd.f32 %v2361, %v2365
    %v2372 = vadd.f32 %v2362, %v2366
    %2373 = vst [vmem:[#allocation16] sm:$0xff] %v2369
    %2374 = vst [vmem:[#allocation16 + $0x8] sm:$0xff] %v2370
    %2375 = vst [vmem:[#allocation16 + $0x10] sm:$0x3f] %v2371
    %2376 = vst [vmem:[#allocation16 + $0x18] sm:$0x3f] %v2372
    // Predicated region
    $region78: #{tpu_custom_call.1} parent=1 // pred_check
      _
    $region79: #{tpu_custom_call.1} parent=1 // pred_check_branch
      %2378 = sbr.rel (0) target = $region81
    $region80: #{tpu_custom_call.1} parent=1 // pred_region
      %2380 = vsyncadd [#allocation4], 0
      %s2381 = sshll.u32 [#allocation16], 4
      %s2382 = int_to_ptr.vmem [resolvable:$true] %s2381
      %s2383 = sshll.u32 %s10, 4
      %s2384 = int_to_ptr.hbm [resolvable:$true] %s2383
      %2389 = dma.vmem_to_hbm [thread:$0]  %s2382, 512, %s2384, [#allocation4], 256, 256, 16
    $region81: #{tpu_custom_call.1} parent=1 // pred_fallthru
      _
    // Predicated region
    $region82: #{tpu_custom_call.1} parent=1 // pred_check
      _
    $region83: #{tpu_custom_call.1} parent=1 // pred_check_branch
      %2391 = sbr.rel (0) target = $region85
    $region84: #{tpu_custom_call.1} parent=1 // pred_region
      %2393 = vsyncadd [#allocation18], 0
      %s2395 = sshll.u32 [#allocation17], 4
      %s2396 = int_to_ptr.vmem [resolvable:$true] %s2395
      %s2397 = sshll.u32 %s11, 4
      %s2398 = int_to_ptr.hbm [resolvable:$true] %s2397
      %2400 = dma.vmem_to_hbm [thread:$0]  %s2396, 64, %s2398, [#allocation18]
    $region85: #{tpu_custom_call.1} parent=1 // pred_fallthru
      _
    // Predicated region
    $region86: #{tpu_custom_call.1} parent=1 // pred_check
      _
    $region87: #{tpu_custom_call.1} parent=1 // pred_check_branch
      %2402 = sbr.rel (0) target = $region89
    $region88: #{tpu_custom_call.1} parent=1 // pred_region
      %2404 = dma.done [#allocation4], 512
    $region89: #{tpu_custom_call.1} parent=1 // pred_fallthru
      _
    // Predicated region
    $region90: #{tpu_custom_call.1} parent=1 // pred_check
      _
    $region91: #{tpu_custom_call.1} parent=1 // pred_check_branch
      %2406 = sbr.rel (0) target = $region93
    $region92: #{tpu_custom_call.1} parent=1 // pred_region
      %2408 = dma.done [#allocation18], 64
    $region93: #{tpu_custom_call.1} parent=1 // pred_fallthru
      _
    %2409 = vsyncpa [#allocation3], 1
    %2410 = vsyncpa [#allocation6], 1
    %2411 = vsyncpa [#allocation9], 1
    %2412 = vsyncpa [#allocation12], 1
    %2413 = vsyncpa [#allocation15], 1
    %2414 = vsyncpa [#allocation4], 1
    %2415 = vsyncpa [#allocation18], 1

</llo_original>
